<compile_context>
chip_gen: v5e
topology: v5e:2x2
jax: 0.10.0
libtpu: 0.0.40
codegen_flags: <defaults>
</compile_context>

<pallas_src>
import math

import jax
import jax.numpy as jnp
from jax.experimental import pallas as pl
from jax.experimental.pallas import tpu as pltpu


# --------------------------- fused forward kernel ----------------------------
def _make_fused_kernel(num_layers, seq_len, batch_blk, hidden):
    """Fuse all LSTM layers, all timesteps and the FC head into one kernel."""
    T, bb, H = seq_len, batch_blk, hidden

    def kernel(*refs):
        x_ref = refs[0]                              # (bb, T, F) batch-first
        layer_refs = refs[1:1 + 3 * num_layers]
        fc_w_ref = refs[1 + 3 * num_layers]          # (H, O_pad)
        fc_b_ref = refs[2 + 3 * num_layers]          # (1, O_pad)
        out_ref = refs[3 + 3 * num_layers]           # (bb, O_pad)
        gx_sc = refs[4 + 3 * num_layers]             # VMEM (T, bb, 4H) scratch

        # Weights stay VMEM-resident; load once per kernel invocation.
        wihs = [layer_refs[3 * l][...] for l in range(num_layers)]     # (F_in, 4H)
        whhs = [layer_refs[3 * l + 1][...] for l in range(num_layers)] # (H, 4H)
        biases = [layer_refs[3 * l + 2][...] for l in range(num_layers)]  # (1, 4H)

        # ---- layer-0 input projection hoisted out of the recurrence ---------
        # One in-VMEM transpose to time-major (off the critical path), then a
        # single 2-D (T*bb, F) @ (F, 4H) MXU matmul + one bias broadcast.
        x_tbf = jnp.transpose(x_ref[...], (1, 0, 2))           # (T, bb, F)
        f_in0 = x_tbf.shape[-1]
        x2d = x_tbf.reshape(T * bb, f_in0).astype(wihs[0].dtype)
        gx0 = jnp.dot(x2d, wihs[0],
                      preferred_element_type=jnp.float32) + biases[0]
        # Spill to VMEM so the unrolled recurrence does not keep (T*bb, 4H)
        # live in vregs; per-step loads are contiguous (bb, 4H) slabs.
        gx_sc[...] = gx0.reshape(T, bb, 4 * H)

        def cell(gates, c_prev):
            # Nonlinearities on the full lane-dense (bb, 4H) tile (EUP slot).
            sig = jax.nn.sigmoid(gates)
            tg = jnp.tanh(gates)
            i_g = sig[:, 0 * H:1 * H]
            f_g = sig[:, 1 * H:2 * H]
            g_g = tg[:, 2 * H:3 * H]
            o_g = sig[:, 3 * H:4 * H]
            c_new = f_g * c_prev + i_g * g_g
            h_new = o_g * jnp.tanh(c_new)
            return h_new, c_new

        h = [jnp.zeros((bb, H), jnp.float32) for _ in range(num_layers)]
        c = [jnp.zeros((bb, H), jnp.float32) for _ in range(num_layers)]

        # ---- wavefront schedule over (layer, time) ---------------------------
        # Wave s runs layer L at timestep t = s - L; descending layer order
        # within a wave makes layer L consume h[L-1] exactly as produced in the
        # previous wave, so results match the sequential per-layer recurrence.
        # TODO(synk): for large T, convert the wave loop to
        # lax.fori_loop(..., unroll=True) to bound unrolled code size.
        for wave in range(T + num_layers - 1):
            for layer in reversed(range(num_layers)):
                t = wave - layer
                if t < 0 or t >= T:
                    continue
                whh = whhs[layer]
                if layer == 0:
                    gates = gx_sc[t] + jnp.dot(
                        h[0].astype(whh.dtype), whh,
                        preferred_element_type=jnp.float32)
                else:
                    wih = wihs[layer]
                    gates = (biases[layer]
                             + jnp.dot(h[layer - 1].astype(wih.dtype), wih,
                                       preferred_element_type=jnp.float32)
                             + jnp.dot(h[layer].astype(whh.dtype), whh,
                                       preferred_element_type=jnp.float32))
                h[layer], c[layer] = cell(gates, c[layer])

        # ---- fused, lane-dense FC head on the last layer / last timestep ----
        out_ref[...] = (
            jnp.dot(h[-1].astype(fc_w_ref.dtype), fc_w_ref[...],
                    preferred_element_type=jnp.float32)
            + fc_b_ref[...]
        )

    return kernel


def _lstm_forward(params, x_btf, batch_block=None):
    """x_btf: (B, T, input_size), batch_first like the PyTorch module.

    batch_block: optional batch tile size. Default = B (single program), the
    right choice on 1-TC chips since the kernel is latency-bound on the serial
    recurrence. On v7x (2 TensorCores) use batch_block = B // 2 so the
    "parallel" grid axis puts one batch block on each core.
    """
    x = x_btf.astype(jnp.float32)
    B, T, F = x.shape
    layers = params["layers"]
    num_layers = len(layers)
    H = layers[0]["whh_t"].shape[0]
    O = params["fc_w_t"].shape[1]
    O_pad = ((O + 127) // 128) * 128           # lane-dense FC output slab

    bb = B if batch_block is None else int(batch_block)
    assert B % bb == 0, "batch_block must divide batch"
    n_blk = B // bb

    # Pad FC weight/bias columns to the lane-dense width (zeros -> exact).
    fc_w = jnp.pad(params["fc_w_t"], ((0, 0), (0, O_pad - O)))
    fc_b = jnp.pad(params["fc_b"], ((0, 0), (0, O_pad - O)))

    # Leading batch-block axis is squeezed (None) so the last two block dims
    # always equal the full array dims regardless of bb.
    x4 = x.reshape(n_blk, bb, T, F)

    args = [x4]
    in_specs = [pl.BlockSpec((None, bb, T, F), lambda i: (i, 0, 0, 0))]
    for lp in layers:
        f_in = lp["wih_t"].shape[0]
        args.extend([lp["wih_t"], lp["whh_t"], lp["bias"]])
        in_specs.extend([
            pl.BlockSpec((f_in, 4 * H), lambda i: (0, 0)),
            pl.BlockSpec((H, 4 * H), lambda i: (0, 0)),
            pl.BlockSpec((1, 4 * H), lambda i: (0, 0)),
        ])
    args.extend([fc_w, fc_b])
    in_specs.extend([
        pl.BlockSpec((H, O_pad), lambda i: (0, 0)),
        pl.BlockSpec((1, O_pad), lambda i: (0, 0)),
    ])

    kernel = _make_fused_kernel(num_layers, T, bb, H)
    out_pad = pl.pallas_call(
        kernel,
        out_shape=jax.ShapeDtypeStruct((n_blk, bb, O_pad), jnp.float32),
        grid=(n_blk,),
        in_specs=in_specs,
        out_specs=pl.BlockSpec((None, bb, O_pad), lambda i: (i, 0, 0)),
        scratch_shapes=[pltpu.VMEM((T, bb, 4 * H), jnp.float32)],
        compiler_params=pltpu.CompilerParams(
            # Batch blocks are independent -> sharded across TensorCores on
            # v7x. (Production scaling: raise vmem_limit_bytes here on v5e/v6e,
            # and consider pl.Buffered(1) / per-layer weight streaming on v7x.)
            dimension_semantics=("parallel",),
        ),
    )(*args)
    return out_pad.reshape(B, O_pad)[:, :O]


lstm_many_to_one = jax.jit(_lstm_forward, static_argnames=("batch_block",))


# ------------------------------ parameter init --------------------------------
def init_lstm_params(key, input_size, hidden_size, num_layers, output_size,
                     param_dtype=jnp.float32):
    """Deterministic init mimicking PyTorch's U(-1/sqrt(H), 1/sqrt(H)).

    param_dtype applies to the matmul weights only (biases / recurrent state
    stay f32). Use jnp.bfloat16 at production H for VMEM / MXU throughput
    (re-validate tolerance: recurrent error compounds over T and layers).
    """
    params = {"layers": []}
    bound = 1.0 / math.sqrt(hidden_size)
    for layer in range(num_layers):
        in_f = input_size if layer == 0 else hidden_size
        key, k1, k2, k3, k4 = jax.random.split(key, 5)
        wih = jax.random.uniform(k1, (4 * hidden_size, in_f), jnp.float32,
                                 -bound, bound)
        whh = jax.random.uniform(k2, (4 * hidden_size, hidden_size), jnp.float32,
                                 -bound, bound)
        b_ih = jax.random.uniform(k3, (4 * hidden_size,), jnp.float32,
                                  -bound, bound)
        b_hh = jax.random.uniform(k4, (4 * hidden_size,), jnp.float32,
                                  -bound, bound)
        params["layers"].append({
            "wih_t": wih.T.astype(param_dtype),               # (in_f, 4H)
            "whh_t": whh.T.astype(param_dtype),               # (H, 4H)
            "bias": (b_ih + b_hh).reshape(1, 4 * hidden_size),  # f32
        })
    key, k5, k6 = jax.random.split(key, 3)
    fc_bound = 1.0 / math.sqrt(hidden_size)
    fc_w = jax.random.uniform(k5, (output_size, hidden_size), jnp.float32,
                              -fc_bound, fc_bound)
    fc_b = jax.random.uniform(k6, (output_size,), jnp.float32,
                              -fc_bound, fc_bound)
    params["fc_w_t"] = fc_w.T.astype(param_dtype)             # (H, O)
    params["fc_b"] = fc_b.reshape(1, output_size)
    return params


# ------------------------------ reference (JAX) --------------------------------
def lstm_many_to_one_ref(params, x_btf):
    x = jnp.transpose(x_btf, (1, 0, 2)).astype(jnp.float32)   # (T, B, F)
    for layer_p in params["layers"]:
        H = layer_p["whh_t"].shape[0]
        B = x.shape[1]
        h = jnp.zeros((B, H), jnp.float32)
        c = jnp.zeros((B, H), jnp.float32)

        def step(carry, x_t, layer_p=layer_p, H=H):
            h, c = carry
            g = (x_t @ layer_p["wih_t"].astype(jnp.float32)
                 + h @ layer_p["whh_t"].astype(jnp.float32)
                 + layer_p["bias"])
            i = jax.nn.sigmoid(g[:, 0 * H:1 * H])
            f = jax.nn.sigmoid(g[:, 1 * H:2 * H])
            gg = jnp.tanh(g[:, 2 * H:3 * H])
            o = jax.nn.sigmoid(g[:, 3 * H:4 * H])
            c = f * c + i * gg
            h = o * jnp.tanh(c)
            return (h, c), h

        (_, _), hs = jax.lax.scan(step, (h, c), x)
        x = hs
    return x[-1] @ params["fc_w_t"].astype(jnp.float32) + params["fc_b"]


# ----------------------------------- main --------------------------------------
if __name__ == "__main__":
    input_size = 16
    hidden_size = 32
    num_layers = 2
    output_size = 4
    batch = 2
    seq = 8

    key = jax.random.PRNGKey(0)
    key_p, key_x = jax.random.split(key)
    params = init_lstm_params(key_p, input_size, hidden_size, num_layers,
                              output_size)
    x = jax.random.normal(key_x, (batch, seq, input_size), jnp.float32)

    out = lstm_many_to_one(params, x)
    out = jax.block_until_ready(out)

    ref = lstm_many_to_one_ref(params, x)
    assert out.shape == (batch, output_size)
    assert jnp.allclose(out, ref, atol=1e-4, rtol=1e-4), "mismatch vs reference"

    # Also exercise the batch-split path (v7x: one batch block per TensorCore
    # via the "parallel" grid axis); identical results required.
    out2 = jax.block_until_ready(lstm_many_to_one(params, x, batch_block=1))
    assert jnp.allclose(out2, ref, atol=1e-4, rtol=1e-4), "mismatch (split batch)"

    print("KERNEL_OK")
</pallas_src>

<mosaic_0001>
module attributes {stable_mosaic.version = 11 : i64} {
  func.func @kernel(%arg0: i32, %arg1: memref<1x2x8x16xf32, #tpu.memory_space<vmem>>, %arg2: memref<16x128xf32, #tpu.memory_space<vmem>>, %arg3: memref<32x128xf32, #tpu.memory_space<vmem>>, %arg4: memref<1x128xf32, #tpu.memory_space<vmem>>, %arg5: memref<32x128xf32, #tpu.memory_space<vmem>>, %arg6: memref<32x128xf32, #tpu.memory_space<vmem>>, %arg7: memref<1x128xf32, #tpu.memory_space<vmem>>, %arg8: memref<32x128xf32, #tpu.memory_space<vmem>>, %arg9: memref<1x128xf32, #tpu.memory_space<vmem>>, %arg10: memref<1x2x128xf32, #tpu.memory_space<vmem>>, %arg11: memref<8x2x128xf32, #tpu.memory_space<vmem>>) attributes {dimension_semantics = [#tpu.dimension_semantics<parallel>], iteration_bounds = array<i64: 1>, scalar_prefetch = 0 : i64, scratch_operands = 1 : i64, tpu.core_type = #tpu.core_type<tc>, window_params = [{transform_indices = @transform_0, window_bounds = array<i64: 1, 2, 8, 16>}, {pipeline_mode = #tpu.pipeline_mode<synchronous>, transform_indices = @transform_1, window_bounds = array<i64: 16, 128>}, {pipeline_mode = #tpu.pipeline_mode<synchronous>, transform_indices = @transform_2, window_bounds = array<i64: 32, 128>}, {pipeline_mode = #tpu.pipeline_mode<synchronous>, transform_indices = @transform_3, window_bounds = array<i64: 1, 128>}, {pipeline_mode = #tpu.pipeline_mode<synchronous>, transform_indices = @transform_4, window_bounds = array<i64: 32, 128>}, {pipeline_mode = #tpu.pipeline_mode<synchronous>, transform_indices = @transform_5, window_bounds = array<i64: 32, 128>}, {pipeline_mode = #tpu.pipeline_mode<synchronous>, transform_indices = @transform_6, window_bounds = array<i64: 1, 128>}, {pipeline_mode = #tpu.pipeline_mode<synchronous>, transform_indices = @transform_7, window_bounds = array<i64: 32, 128>}, {pipeline_mode = #tpu.pipeline_mode<synchronous>, transform_indices = @transform_8, window_bounds = array<i64: 1, 128>}, {transform_indices = @transform_9, window_bounds = array<i64: 1, 2, 128>}]} {
    %c0 = arith.constant 0 : index
    %c0_0 = arith.constant 0 : index
    %0 = vector.load %arg2[%c0, %c0_0] : memref<16x128xf32, #tpu.memory_space<vmem>>, vector<16x128xf32>
    %c0_1 = arith.constant 0 : index
    %c0_2 = arith.constant 0 : index
    %1 = vector.load %arg5[%c0_1, %c0_2] : memref<32x128xf32, #tpu.memory_space<vmem>>, vector<32x128xf32>
    %c0_3 = arith.constant 0 : index
    %c0_4 = arith.constant 0 : index
    %2 = vector.load %arg3[%c0_3, %c0_4] : memref<32x128xf32, #tpu.memory_space<vmem>>, vector<32x128xf32>
    %c0_5 = arith.constant 0 : index
    %c0_6 = arith.constant 0 : index
    %3 = vector.load %arg6[%c0_5, %c0_6] : memref<32x128xf32, #tpu.memory_space<vmem>>, vector<32x128xf32>
    %c0_7 = arith.constant 0 : index
    %c0_8 = arith.constant 0 : index
    %4 = vector.load %arg4[%c0_7, %c0_8] : memref<1x128xf32, #tpu.memory_space<vmem>>, vector<1x128xf32>
    %c0_9 = arith.constant 0 : index
    %c0_10 = arith.constant 0 : index
    %5 = vector.load %arg7[%c0_9, %c0_10] : memref<1x128xf32, #tpu.memory_space<vmem>>, vector<1x128xf32>
    %c0_11 = arith.constant 0 : index
    %c0_12 = arith.constant 0 : index
    %c0_13 = arith.constant 0 : index
    %c0_14 = arith.constant 0 : index
    %6 = vector.load %arg1[%c0_11, %c0_12, %c0_13, %c0_14] : memref<1x2x8x16xf32, #tpu.memory_space<vmem>>, vector<1x2x8x16xf32>
    %7 = vector.shape_cast %6 : vector<1x2x8x16xf32> to vector<2x8x16xf32>
    %8 = tpu.transpose %7, [1, 0, 2] : vector<2x8x16xf32> -> vector<8x2x16xf32>
    %9 = vector.shape_cast %8 : vector<8x2x16xf32> to vector<16x16xf32>
    %cst = arith.constant dense<0.000000e+00> : vector<16x128xf32>
    %10 = tpu.matmul %9, %0, %cst {dimension_numbers = #tpu.dot_dimension_numbers<[1], [0], [0], [1], [0, 0, 1, 1], [], []>} : vector<16x16xf32>, vector<16x128xf32>, vector<16x128xf32> -> vector<16x128xf32>
    %11 = vector.broadcast %4 : vector<1x128xf32> to vector<16x128xf32>
    %12 = arith.addf %10, %11 : vector<16x128xf32>
    %13 = vector.shape_cast %12 : vector<16x128xf32> to vector<8x2x128xf32>
    %c0_15 = arith.constant 0 : index
    %c0_16 = arith.constant 0 : index
    %c0_17 = arith.constant 0 : index
    %14 = vector.load %arg11[%c0_15, %c0_16, %c0_17] : memref<8x2x128xf32, #tpu.memory_space<vmem>>, vector<8x2x128xf32>
    tpu.vector_store %arg11[%c0_15, %c0_16, %c0_17], %13 {strides = array<i32>} : memref<8x2x128xf32, #tpu.memory_space<vmem>>, vector<8x2x128xf32>,
    %cst_18 = arith.constant 0.000000e+00 : f32
    %15 = vector.broadcast %cst_18 : f32 to vector<2x32xf32>
    %cst_19 = arith.constant 0.000000e+00 : f32
    %16 = vector.broadcast %cst_19 : f32 to vector<2x32xf32>
    %cst_20 = arith.constant 0.000000e+00 : f32
    %17 = vector.broadcast %cst_20 : f32 to vector<2x32xf32>
    %cst_21 = arith.constant 0.000000e+00 : f32
    %18 = vector.broadcast %cst_21 : f32 to vector<2x32xf32>
    %c0_22 = arith.constant 0 : index
    %c0_23 = arith.constant 0 : index
    %c0_24 = arith.constant 0 : index
    %19 = vector.load %arg11[%c0_22, %c0_23, %c0_24] : memref<8x2x128xf32, #tpu.memory_space<vmem>>, vector<1x2x128xf32>
    %20 = vector.shape_cast %19 : vector<1x2x128xf32> to vector<2x128xf32>
    %cst_25 = arith.constant dense<0.000000e+00> : vector<2x128xf32>
    %21 = tpu.matmul %15, %2, %cst_25 {dimension_numbers = #tpu.dot_dimension_numbers<[1], [0], [0], [1], [0, 0, 1, 1], [], []>} : vector<2x32xf32>, vector<32x128xf32>, vector<2x128xf32> -> vector<2x128xf32>
    %22 = arith.addf %20, %21 : vector<2x128xf32>
    %23 = arith.negf %22 : vector<2x128xf32>
    %24 = math.exp %23 : vector<2x128xf32>
    %cst_26 = arith.constant 1.000000e+00 : f32
    %25 = vector.broadcast %cst_26 : f32 to vector<2x128xf32>
    %26 = arith.addf %25, %24 : vector<2x128xf32>
    %27 = arith.divf %25, %26 : vector<2x128xf32>
    %28 = math.tanh %22 : vector<2x128xf32>
    %29 = vector.extract_strided_slice %27 {offsets = [0, 0], sizes = [2, 32], strides = [1, 1]} : vector<2x128xf32> to vector<2x32xf32>
    %30 = vector.extract_strided_slice %27 {offsets = [0, 32], sizes = [2, 32], strides = [1, 1]} : vector<2x128xf32> to vector<2x32xf32>
    %31 = vector.extract_strided_slice %28 {offsets = [0, 64], sizes = [2, 32], strides = [1, 1]} : vector<2x128xf32> to vector<2x32xf32>
    %32 = vector.extract_strided_slice %27 {offsets = [0, 96], sizes = [2, 32], strides = [1, 1]} : vector<2x128xf32> to vector<2x32xf32>
    %33 = arith.mulf %30, %17 : vector<2x32xf32>
    %34 = arith.mulf %29, %31 : vector<2x32xf32>
    %35 = arith.addf %33, %34 : vector<2x32xf32>
    %36 = math.tanh %35 : vector<2x32xf32>
    %37 = arith.mulf %32, %36 : vector<2x32xf32>
    %cst_27 = arith.constant dense<0.000000e+00> : vector<2x128xf32>
    %38 = tpu.matmul %37, %1, %cst_27 {dimension_numbers = #tpu.dot_dimension_numbers<[1], [0], [0], [1], [0, 0, 1, 1], [], []>} : vector<2x32xf32>, vector<32x128xf32>, vector<2x128xf32> -> vector<2x128xf32>
    %39 = vector.broadcast %5 : vector<1x128xf32> to vector<2x128xf32>
    %40 = arith.addf %39, %38 : vector<2x128xf32>
    %cst_28 = arith.constant dense<0.000000e+00> : vector<2x128xf32>
    %41 = tpu.matmul %16, %3, %cst_28 {dimension_numbers = #tpu.dot_dimension_numbers<[1], [0], [0], [1], [0, 0, 1, 1], [], []>} : vector<2x32xf32>, vector<32x128xf32>, vector<2x128xf32> -> vector<2x128xf32>
    %42 = arith.addf %40, %41 : vector<2x128xf32>
    %43 = arith.negf %42 : vector<2x128xf32>
    %44 = math.exp %43 : vector<2x128xf32>
    %cst_29 = arith.constant 1.000000e+00 : f32
    %45 = vector.broadcast %cst_29 : f32 to vector<2x128xf32>
    %46 = arith.addf %45, %44 : vector<2x128xf32>
    %47 = arith.divf %45, %46 : vector<2x128xf32>
    %48 = math.tanh %42 : vector<2x128xf32>
    %49 = vector.extract_strided_slice %47 {offsets = [0, 0], sizes = [2, 32], strides = [1, 1]} : vector<2x128xf32> to vector<2x32xf32>
    %50 = vector.extract_strided_slice %47 {offsets = [0, 32], sizes = [2, 32], strides = [1, 1]} : vector<2x128xf32> to vector<2x32xf32>
    %51 = vector.extract_strided_slice %48 {offsets = [0, 64], sizes = [2, 32], strides = [1, 1]} : vector<2x128xf32> to vector<2x32xf32>
    %52 = vector.extract_strided_slice %47 {offsets = [0, 96], sizes = [2, 32], strides = [1, 1]} : vector<2x128xf32> to vector<2x32xf32>
    %53 = arith.mulf %50, %18 : vector<2x32xf32>
    %54 = arith.mulf %49, %51 : vector<2x32xf32>
    %55 = arith.addf %53, %54 : vector<2x32xf32>
    %56 = math.tanh %55 : vector<2x32xf32>
    %57 = arith.mulf %52, %56 : vector<2x32xf32>
    %c1 = arith.constant 1 : index
    %c0_30 = arith.constant 0 : index
    %c0_31 = arith.constant 0 : index
    %58 = vector.load %arg11[%c1, %c0_30, %c0_31] : memref<8x2x128xf32, #tpu.memory_space<vmem>>, vector<1x2x128xf32>
    %59 = vector.shape_cast %58 : vector<1x2x128xf32> to vector<2x128xf32>
    %cst_32 = arith.constant dense<0.000000e+00> : vector<2x128xf32>
    %60 = tpu.matmul %37, %2, %cst_32 {dimension_numbers = #tpu.dot_dimension_numbers<[1], [0], [0], [1], [0, 0, 1, 1], [], []>} : vector<2x32xf32>, vector<32x128xf32>, vector<2x128xf32> -> vector<2x128xf32>
    %61 = arith.addf %59, %60 : vector<2x128xf32>
    %62 = arith.negf %61 : vector<2x128xf32>
    %63 = math.exp %62 : vector<2x128xf32>
    %cst_33 = arith.constant 1.000000e+00 : f32
    %64 = vector.broadcast %cst_33 : f32 to vector<2x128xf32>
    %65 = arith.addf %64, %63 : vector<2x128xf32>
    %66 = arith.divf %64, %65 : vector<2x128xf32>
    %67 = math.tanh %61 : vector<2x128xf32>
    %68 = vector.extract_strided_slice %66 {offsets = [0, 0], sizes = [2, 32], strides = [1, 1]} : vector<2x128xf32> to vector<2x32xf32>
    %69 = vector.extract_strided_slice %66 {offsets = [0, 32], sizes = [2, 32], strides = [1, 1]} : vector<2x128xf32> to vector<2x32xf32>
    %70 = vector.extract_strided_slice %67 {offsets = [0, 64], sizes = [2, 32], strides = [1, 1]} : vector<2x128xf32> to vector<2x32xf32>
    %71 = vector.extract_strided_slice %66 {offsets = [0, 96], sizes = [2, 32], strides = [1, 1]} : vector<2x128xf32> to vector<2x32xf32>
    %72 = arith.mulf %69, %35 : vector<2x32xf32>
    %73 = arith.mulf %68, %70 : vector<2x32xf32>
    %74 = arith.addf %72, %73 : vector<2x32xf32>
    %75 = math.tanh %74 : vector<2x32xf32>
    %76 = arith.mulf %71, %75 : vector<2x32xf32>
    %cst_34 = arith.constant dense<0.000000e+00> : vector<2x128xf32>
    %77 = tpu.matmul %76, %1, %cst_34 {dimension_numbers = #tpu.dot_dimension_numbers<[1], [0], [0], [1], [0, 0, 1, 1], [], []>} : vector<2x32xf32>, vector<32x128xf32>, vector<2x128xf32> -> vector<2x128xf32>
    %78 = vector.broadcast %5 : vector<1x128xf32> to vector<2x128xf32>
    %79 = arith.addf %78, %77 : vector<2x128xf32>
    %cst_35 = arith.constant dense<0.000000e+00> : vector<2x128xf32>
    %80 = tpu.matmul %57, %3, %cst_35 {dimension_numbers = #tpu.dot_dimension_numbers<[1], [0], [0], [1], [0, 0, 1, 1], [], []>} : vector<2x32xf32>, vector<32x128xf32>, vector<2x128xf32> -> vector<2x128xf32>
    %81 = arith.addf %79, %80 : vector<2x128xf32>
    %82 = arith.negf %81 : vector<2x128xf32>
    %83 = math.exp %82 : vector<2x128xf32>
    %cst_36 = arith.constant 1.000000e+00 : f32
    %84 = vector.broadcast %cst_36 : f32 to vector<2x128xf32>
    %85 = arith.addf %84, %83 : vector<2x128xf32>
    %86 = arith.divf %84, %85 : vector<2x128xf32>
    %87 = math.tanh %81 : vector<2x128xf32>
    %88 = vector.extract_strided_slice %86 {offsets = [0, 0], sizes = [2, 32], strides = [1, 1]} : vector<2x128xf32> to vector<2x32xf32>
    %89 = vector.extract_strided_slice %86 {offsets = [0, 32], sizes = [2, 32], strides = [1, 1]} : vector<2x128xf32> to vector<2x32xf32>
    %90 = vector.extract_strided_slice %87 {offsets = [0, 64], sizes = [2, 32], strides = [1, 1]} : vector<2x128xf32> to vector<2x32xf32>
    %91 = vector.extract_strided_slice %86 {offsets = [0, 96], sizes = [2, 32], strides = [1, 1]} : vector<2x128xf32> to vector<2x32xf32>
    %92 = arith.mulf %89, %55 : vector<2x32xf32>
    %93 = arith.mulf %88, %90 : vector<2x32xf32>
    %94 = arith.addf %92, %93 : vector<2x32xf32>
    %95 = math.tanh %94 : vector<2x32xf32>
    %96 = arith.mulf %91, %95 : vector<2x32xf32>
    %c2 = arith.constant 2 : index
    %c0_37 = arith.constant 0 : index
    %c0_38 = arith.constant 0 : index
    %97 = vector.load %arg11[%c2, %c0_37, %c0_38] : memref<8x2x128xf32, #tpu.memory_space<vmem>>, vector<1x2x128xf32>
    %98 = vector.shape_cast %97 : vector<1x2x128xf32> to vector<2x128xf32>
    %cst_39 = arith.constant dense<0.000000e+00> : vector<2x128xf32>
    %99 = tpu.matmul %76, %2, %cst_39 {dimension_numbers = #tpu.dot_dimension_numbers<[1], [0], [0], [1], [0, 0, 1, 1], [], []>} : vector<2x32xf32>, vector<32x128xf32>, vector<2x128xf32> -> vector<2x128xf32>
    %100 = arith.addf %98, %99 : vector<2x128xf32>
    %101 = arith.negf %100 : vector<2x128xf32>
    %102 = math.exp %101 : vector<2x128xf32>
    %cst_40 = arith.constant 1.000000e+00 : f32
    %103 = vector.broadcast %cst_40 : f32 to vector<2x128xf32>
    %104 = arith.addf %103, %102 : vector<2x128xf32>
    %105 = arith.divf %103, %104 : vector<2x128xf32>
    %106 = math.tanh %100 : vector<2x128xf32>
    %107 = vector.extract_strided_slice %105 {offsets = [0, 0], sizes = [2, 32], strides = [1, 1]} : vector<2x128xf32> to vector<2x32xf32>
    %108 = vector.extract_strided_slice %105 {offsets = [0, 32], sizes = [2, 32], strides = [1, 1]} : vector<2x128xf32> to vector<2x32xf32>
    %109 = vector.extract_strided_slice %106 {offsets = [0, 64], sizes = [2, 32], strides = [1, 1]} : vector<2x128xf32> to vector<2x32xf32>
    %110 = vector.extract_strided_slice %105 {offsets = [0, 96], sizes = [2, 32], strides = [1, 1]} : vector<2x128xf32> to vector<2x32xf32>
    %111 = arith.mulf %108, %74 : vector<2x32xf32>
    %112 = arith.mulf %107, %109 : vector<2x32xf32>
    %113 = arith.addf %111, %112 : vector<2x32xf32>
    %114 = math.tanh %113 : vector<2x32xf32>
    %115 = arith.mulf %110, %114 : vector<2x32xf32>
    %cst_41 = arith.constant dense<0.000000e+00> : vector<2x128xf32>
    %116 = tpu.matmul %115, %1, %cst_41 {dimension_numbers = #tpu.dot_dimension_numbers<[1], [0], [0], [1], [0, 0, 1, 1], [], []>} : vector<2x32xf32>, vector<32x128xf32>, vector<2x128xf32> -> vector<2x128xf32>
    %117 = vector.broadcast %5 : vector<1x128xf32> to vector<2x128xf32>
    %118 = arith.addf %117, %116 : vector<2x128xf32>
    %cst_42 = arith.constant dense<0.000000e+00> : vector<2x128xf32>
    %119 = tpu.matmul %96, %3, %cst_42 {dimension_numbers = #tpu.dot_dimension_numbers<[1], [0], [0], [1], [0, 0, 1, 1], [], []>} : vector<2x32xf32>, vector<32x128xf32>, vector<2x128xf32> -> vector<2x128xf32>
    %120 = arith.addf %118, %119 : vector<2x128xf32>
    %121 = arith.negf %120 : vector<2x128xf32>
    %122 = math.exp %121 : vector<2x128xf32>
    %cst_43 = arith.constant 1.000000e+00 : f32
    %123 = vector.broadcast %cst_43 : f32 to vector<2x128xf32>
    %124 = arith.addf %123, %122 : vector<2x128xf32>
    %125 = arith.divf %123, %124 : vector<2x128xf32>
    %126 = math.tanh %120 : vector<2x128xf32>
    %127 = vector.extract_strided_slice %125 {offsets = [0, 0], sizes = [2, 32], strides = [1, 1]} : vector<2x128xf32> to vector<2x32xf32>
    %128 = vector.extract_strided_slice %125 {offsets = [0, 32], sizes = [2, 32], strides = [1, 1]} : vector<2x128xf32> to vector<2x32xf32>
    %129 = vector.extract_strided_slice %126 {offsets = [0, 64], sizes = [2, 32], strides = [1, 1]} : vector<2x128xf32> to vector<2x32xf32>
    %130 = vector.extract_strided_slice %125 {offsets = [0, 96], sizes = [2, 32], strides = [1, 1]} : vector<2x128xf32> to vector<2x32xf32>
    %131 = arith.mulf %128, %94 : vector<2x32xf32>
    %132 = arith.mulf %127, %129 : vector<2x32xf32>
    %133 = arith.addf %131, %132 : vector<2x32xf32>
    %134 = math.tanh %133 : vector<2x32xf32>
    %135 = arith.mulf %130, %134 : vector<2x32xf32>
    %c3 = arith.constant 3 : index
    %c0_44 = arith.constant 0 : index
    %c0_45 = arith.constant 0 : index
    %136 = vector.load %arg11[%c3, %c0_44, %c0_45] : memref<8x2x128xf32, #tpu.memory_space<vmem>>, vector<1x2x128xf32>
    %137 = vector.shape_cast %136 : vector<1x2x128xf32> to vector<2x128xf32>
    %cst_46 = arith.constant dense<0.000000e+00> : vector<2x128xf32>
    %138 = tpu.matmul %115, %2, %cst_46 {dimension_numbers = #tpu.dot_dimension_numbers<[1], [0], [0], [1], [0, 0, 1, 1], [], []>} : vector<2x32xf32>, vector<32x128xf32>, vector<2x128xf32> -> vector<2x128xf32>
    %139 = arith.addf %137, %138 : vector<2x128xf32>
    %140 = arith.negf %139 : vector<2x128xf32>
    %141 = math.exp %140 : vector<2x128xf32>
    %cst_47 = arith.constant 1.000000e+00 : f32
    %142 = vector.broadcast %cst_47 : f32 to vector<2x128xf32>
    %143 = arith.addf %142, %141 : vector<2x128xf32>
    %144 = arith.divf %142, %143 : vector<2x128xf32>
    %145 = math.tanh %139 : vector<2x128xf32>
    %146 = vector.extract_strided_slice %144 {offsets = [0, 0], sizes = [2, 32], strides = [1, 1]} : vector<2x128xf32> to vector<2x32xf32>
    %147 = vector.extract_strided_slice %144 {offsets = [0, 32], sizes = [2, 32], strides = [1, 1]} : vector<2x128xf32> to vector<2x32xf32>
    %148 = vector.extract_strided_slice %145 {offsets = [0, 64], sizes = [2, 32], strides = [1, 1]} : vector<2x128xf32> to vector<2x32xf32>
    %149 = vector.extract_strided_slice %144 {offsets = [0, 96], sizes = [2, 32], strides = [1, 1]} : vector<2x128xf32> to vector<2x32xf32>
    %150 = arith.mulf %147, %113 : vector<2x32xf32>
    %151 = arith.mulf %146, %148 : vector<2x32xf32>
    %152 = arith.addf %150, %151 : vector<2x32xf32>
    %153 = math.tanh %152 : vector<2x32xf32>
    %154 = arith.mulf %149, %153 : vector<2x32xf32>
    %cst_48 = arith.constant dense<0.000000e+00> : vector<2x128xf32>
    %155 = tpu.matmul %154, %1, %cst_48 {dimension_numbers = #tpu.dot_dimension_numbers<[1], [0], [0], [1], [0, 0, 1, 1], [], []>} : vector<2x32xf32>, vector<32x128xf32>, vector<2x128xf32> -> vector<2x128xf32>
    %156 = vector.broadcast %5 : vector<1x128xf32> to vector<2x128xf32>
    %157 = arith.addf %156, %155 : vector<2x128xf32>
    %cst_49 = arith.constant dense<0.000000e+00> : vector<2x128xf32>
    %158 = tpu.matmul %135, %3, %cst_49 {dimension_numbers = #tpu.dot_dimension_numbers<[1], [0], [0], [1], [0, 0, 1, 1], [], []>} : vector<2x32xf32>, vector<32x128xf32>, vector<2x128xf32> -> vector<2x128xf32>
    %159 = arith.addf %157, %158 : vector<2x128xf32>
    %160 = arith.negf %159 : vector<2x128xf32>
    %161 = math.exp %160 : vector<2x128xf32>
    %cst_50 = arith.constant 1.000000e+00 : f32
    %162 = vector.broadcast %cst_50 : f32 to vector<2x128xf32>
    %163 = arith.addf %162, %161 : vector<2x128xf32>
    %164 = arith.divf %162, %163 : vector<2x128xf32>
    %165 = math.tanh %159 : vector<2x128xf32>
    %166 = vector.extract_strided_slice %164 {offsets = [0, 0], sizes = [2, 32], strides = [1, 1]} : vector<2x128xf32> to vector<2x32xf32>
    %167 = vector.extract_strided_slice %164 {offsets = [0, 32], sizes = [2, 32], strides = [1, 1]} : vector<2x128xf32> to vector<2x32xf32>
    %168 = vector.extract_strided_slice %165 {offsets = [0, 64], sizes = [2, 32], strides = [1, 1]} : vector<2x128xf32> to vector<2x32xf32>
    %169 = vector.extract_strided_slice %164 {offsets = [0, 96], sizes = [2, 32], strides = [1, 1]} : vector<2x128xf32> to vector<2x32xf32>
    %170 = arith.mulf %167, %133 : vector<2x32xf32>
    %171 = arith.mulf %166, %168 : vector<2x32xf32>
    %172 = arith.addf %170, %171 : vector<2x32xf32>
    %173 = math.tanh %172 : vector<2x32xf32>
    %174 = arith.mulf %169, %173 : vector<2x32xf32>
    %c4 = arith.constant 4 : index
    %c0_51 = arith.constant 0 : index
    %c0_52 = arith.constant 0 : index
    %175 = vector.load %arg11[%c4, %c0_51, %c0_52] : memref<8x2x128xf32, #tpu.memory_space<vmem>>, vector<1x2x128xf32>
    %176 = vector.shape_cast %175 : vector<1x2x128xf32> to vector<2x128xf32>
    %cst_53 = arith.constant dense<0.000000e+00> : vector<2x128xf32>
    %177 = tpu.matmul %154, %2, %cst_53 {dimension_numbers = #tpu.dot_dimension_numbers<[1], [0], [0], [1], [0, 0, 1, 1], [], []>} : vector<2x32xf32>, vector<32x128xf32>, vector<2x128xf32> -> vector<2x128xf32>
    %178 = arith.addf %176, %177 : vector<2x128xf32>
    %179 = arith.negf %178 : vector<2x128xf32>
    %180 = math.exp %179 : vector<2x128xf32>
    %cst_54 = arith.constant 1.000000e+00 : f32
    %181 = vector.broadcast %cst_54 : f32 to vector<2x128xf32>
    %182 = arith.addf %181, %180 : vector<2x128xf32>
    %183 = arith.divf %181, %182 : vector<2x128xf32>
    %184 = math.tanh %178 : vector<2x128xf32>
    %185 = vector.extract_strided_slice %183 {offsets = [0, 0], sizes = [2, 32], strides = [1, 1]} : vector<2x128xf32> to vector<2x32xf32>
    %186 = vector.extract_strided_slice %183 {offsets = [0, 32], sizes = [2, 32], strides = [1, 1]} : vector<2x128xf32> to vector<2x32xf32>
    %187 = vector.extract_strided_slice %184 {offsets = [0, 64], sizes = [2, 32], strides = [1, 1]} : vector<2x128xf32> to vector<2x32xf32>
    %188 = vector.extract_strided_slice %183 {offsets = [0, 96], sizes = [2, 32], strides = [1, 1]} : vector<2x128xf32> to vector<2x32xf32>
    %189 = arith.mulf %186, %152 : vector<2x32xf32>
    %190 = arith.mulf %185, %187 : vector<2x32xf32>
    %191 = arith.addf %189, %190 : vector<2x32xf32>
    %192 = math.tanh %191 : vector<2x32xf32>
    %193 = arith.mulf %188, %192 : vector<2x32xf32>
    %cst_55 = arith.constant dense<0.000000e+00> : vector<2x128xf32>
    %194 = tpu.matmul %193, %1, %cst_55 {dimension_numbers = #tpu.dot_dimension_numbers<[1], [0], [0], [1], [0, 0, 1, 1], [], []>} : vector<2x32xf32>, vector<32x128xf32>, vector<2x128xf32> -> vector<2x128xf32>
    %195 = vector.broadcast %5 : vector<1x128xf32> to vector<2x128xf32>
    %196 = arith.addf %195, %194 : vector<2x128xf32>
    %cst_56 = arith.constant dense<0.000000e+00> : vector<2x128xf32>
    %197 = tpu.matmul %174, %3, %cst_56 {dimension_numbers = #tpu.dot_dimension_numbers<[1], [0], [0], [1], [0, 0, 1, 1], [], []>} : vector<2x32xf32>, vector<32x128xf32>, vector<2x128xf32> -> vector<2x128xf32>
    %198 = arith.addf %196, %197 : vector<2x128xf32>
    %199 = arith.negf %198 : vector<2x128xf32>
    %200 = math.exp %199 : vector<2x128xf32>
    %cst_57 = arith.constant 1.000000e+00 : f32
    %201 = vector.broadcast %cst_57 : f32 to vector<2x128xf32>
    %202 = arith.addf %201, %200 : vector<2x128xf32>
    %203 = arith.divf %201, %202 : vector<2x128xf32>
    %204 = math.tanh %198 : vector<2x128xf32>
    %205 = vector.extract_strided_slice %203 {offsets = [0, 0], sizes = [2, 32], strides = [1, 1]} : vector<2x128xf32> to vector<2x32xf32>
    %206 = vector.extract_strided_slice %203 {offsets = [0, 32], sizes = [2, 32], strides = [1, 1]} : vector<2x128xf32> to vector<2x32xf32>
    %207 = vector.extract_strided_slice %204 {offsets = [0, 64], sizes = [2, 32], strides = [1, 1]} : vector<2x128xf32> to vector<2x32xf32>
    %208 = vector.extract_strided_slice %203 {offsets = [0, 96], sizes = [2, 32], strides = [1, 1]} : vector<2x128xf32> to vector<2x32xf32>
    %209 = arith.mulf %206, %172 : vector<2x32xf32>
    %210 = arith.mulf %205, %207 : vector<2x32xf32>
    %211 = arith.addf %209, %210 : vector<2x32xf32>
    %212 = math.tanh %211 : vector<2x32xf32>
    %213 = arith.mulf %208, %212 : vector<2x32xf32>
    %c5 = arith.constant 5 : index
    %c0_58 = arith.constant 0 : index
    %c0_59 = arith.constant 0 : index
    %214 = vector.load %arg11[%c5, %c0_58, %c0_59] : memref<8x2x128xf32, #tpu.memory_space<vmem>>, vector<1x2x128xf32>
    %215 = vector.shape_cast %214 : vector<1x2x128xf32> to vector<2x128xf32>
    %cst_60 = arith.constant dense<0.000000e+00> : vector<2x128xf32>
    %216 = tpu.matmul %193, %2, %cst_60 {dimension_numbers = #tpu.dot_dimension_numbers<[1], [0], [0], [1], [0, 0, 1, 1], [], []>} : vector<2x32xf32>, vector<32x128xf32>, vector<2x128xf32> -> vector<2x128xf32>
    %217 = arith.addf %215, %216 : vector<2x128xf32>
    %218 = arith.negf %217 : vector<2x128xf32>
    %219 = math.exp %218 : vector<2x128xf32>
    %cst_61 = arith.constant 1.000000e+00 : f32
    %220 = vector.broadcast %cst_61 : f32 to vector<2x128xf32>
    %221 = arith.addf %220, %219 : vector<2x128xf32>
    %222 = arith.divf %220, %221 : vector<2x128xf32>
    %223 = math.tanh %217 : vector<2x128xf32>
    %224 = vector.extract_strided_slice %222 {offsets = [0, 0], sizes = [2, 32], strides = [1, 1]} : vector<2x128xf32> to vector<2x32xf32>
    %225 = vector.extract_strided_slice %222 {offsets = [0, 32], sizes = [2, 32], strides = [1, 1]} : vector<2x128xf32> to vector<2x32xf32>
    %226 = vector.extract_strided_slice %223 {offsets = [0, 64], sizes = [2, 32], strides = [1, 1]} : vector<2x128xf32> to vector<2x32xf32>
    %227 = vector.extract_strided_slice %222 {offsets = [0, 96], sizes = [2, 32], strides = [1, 1]} : vector<2x128xf32> to vector<2x32xf32>
    %228 = arith.mulf %225, %191 : vector<2x32xf32>
    %229 = arith.mulf %224, %226 : vector<2x32xf32>
    %230 = arith.addf %228, %229 : vector<2x32xf32>
    %231 = math.tanh %230 : vector<2x32xf32>
    %232 = arith.mulf %227, %231 : vector<2x32xf32>
    %cst_62 = arith.constant dense<0.000000e+00> : vector<2x128xf32>
    %233 = tpu.matmul %232, %1, %cst_62 {dimension_numbers = #tpu.dot_dimension_numbers<[1], [0], [0], [1], [0, 0, 1, 1], [], []>} : vector<2x32xf32>, vector<32x128xf32>, vector<2x128xf32> -> vector<2x128xf32>
    %234 = vector.broadcast %5 : vector<1x128xf32> to vector<2x128xf32>
    %235 = arith.addf %234, %233 : vector<2x128xf32>
    %cst_63 = arith.constant dense<0.000000e+00> : vector<2x128xf32>
    %236 = tpu.matmul %213, %3, %cst_63 {dimension_numbers = #tpu.dot_dimension_numbers<[1], [0], [0], [1], [0, 0, 1, 1], [], []>} : vector<2x32xf32>, vector<32x128xf32>, vector<2x128xf32> -> vector<2x128xf32>
    %237 = arith.addf %235, %236 : vector<2x128xf32>
    %238 = arith.negf %237 : vector<2x128xf32>
    %239 = math.exp %238 : vector<2x128xf32>
    %cst_64 = arith.constant 1.000000e+00 : f32
    %240 = vector.broadcast %cst_64 : f32 to vector<2x128xf32>
    %241 = arith.addf %240, %239 : vector<2x128xf32>
    %242 = arith.divf %240, %241 : vector<2x128xf32>
    %243 = math.tanh %237 : vector<2x128xf32>
    %244 = vector.extract_strided_slice %242 {offsets = [0, 0], sizes = [2, 32], strides = [1, 1]} : vector<2x128xf32> to vector<2x32xf32>
    %245 = vector.extract_strided_slice %242 {offsets = [0, 32], sizes = [2, 32], strides = [1, 1]} : vector<2x128xf32> to vector<2x32xf32>
    %246 = vector.extract_strided_slice %243 {offsets = [0, 64], sizes = [2, 32], strides = [1, 1]} : vector<2x128xf32> to vector<2x32xf32>
    %247 = vector.extract_strided_slice %242 {offsets = [0, 96], sizes = [2, 32], strides = [1, 1]} : vector<2x128xf32> to vector<2x32xf32>
    %248 = arith.mulf %245, %211 : vector<2x32xf32>
    %249 = arith.mulf %244, %246 : vector<2x32xf32>
    %250 = arith.addf %248, %249 : vector<2x32xf32>
    %251 = math.tanh %250 : vector<2x32xf32>
    %252 = arith.mulf %247, %251 : vector<2x32xf32>
    %c6 = arith.constant 6 : index
    %c0_65 = arith.constant 0 : index
    %c0_66 = arith.constant 0 : index
    %253 = vector.load %arg11[%c6, %c0_65, %c0_66] : memref<8x2x128xf32, #tpu.memory_space<vmem>>, vector<1x2x128xf32>
    %254 = vector.shape_cast %253 : vector<1x2x128xf32> to vector<2x128xf32>
    %cst_67 = arith.constant dense<0.000000e+00> : vector<2x128xf32>
    %255 = tpu.matmul %232, %2, %cst_67 {dimension_numbers = #tpu.dot_dimension_numbers<[1], [0], [0], [1], [0, 0, 1, 1], [], []>} : vector<2x32xf32>, vector<32x128xf32>, vector<2x128xf32> -> vector<2x128xf32>
    %256 = arith.addf %254, %255 : vector<2x128xf32>
    %257 = arith.negf %256 : vector<2x128xf32>
    %258 = math.exp %257 : vector<2x128xf32>
    %cst_68 = arith.constant 1.000000e+00 : f32
    %259 = vector.broadcast %cst_68 : f32 to vector<2x128xf32>
    %260 = arith.addf %259, %258 : vector<2x128xf32>
    %261 = arith.divf %259, %260 : vector<2x128xf32>
    %262 = math.tanh %256 : vector<2x128xf32>
    %263 = vector.extract_strided_slice %261 {offsets = [0, 0], sizes = [2, 32], strides = [1, 1]} : vector<2x128xf32> to vector<2x32xf32>
    %264 = vector.extract_strided_slice %261 {offsets = [0, 32], sizes = [2, 32], strides = [1, 1]} : vector<2x128xf32> to vector<2x32xf32>
    %265 = vector.extract_strided_slice %262 {offsets = [0, 64], sizes = [2, 32], strides = [1, 1]} : vector<2x128xf32> to vector<2x32xf32>
    %266 = vector.extract_strided_slice %261 {offsets = [0, 96], sizes = [2, 32], strides = [1, 1]} : vector<2x128xf32> to vector<2x32xf32>
    %267 = arith.mulf %264, %230 : vector<2x32xf32>
    %268 = arith.mulf %263, %265 : vector<2x32xf32>
    %269 = arith.addf %267, %268 : vector<2x32xf32>
    %270 = math.tanh %269 : vector<2x32xf32>
    %271 = arith.mulf %266, %270 : vector<2x32xf32>
    %cst_69 = arith.constant dense<0.000000e+00> : vector<2x128xf32>
    %272 = tpu.matmul %271, %1, %cst_69 {dimension_numbers = #tpu.dot_dimension_numbers<[1], [0], [0], [1], [0, 0, 1, 1], [], []>} : vector<2x32xf32>, vector<32x128xf32>, vector<2x128xf32> -> vector<2x128xf32>
    %273 = vector.broadcast %5 : vector<1x128xf32> to vector<2x128xf32>
    %274 = arith.addf %273, %272 : vector<2x128xf32>
    %cst_70 = arith.constant dense<0.000000e+00> : vector<2x128xf32>
    %275 = tpu.matmul %252, %3, %cst_70 {dimension_numbers = #tpu.dot_dimension_numbers<[1], [0], [0], [1], [0, 0, 1, 1], [], []>} : vector<2x32xf32>, vector<32x128xf32>, vector<2x128xf32> -> vector<2x128xf32>
    %276 = arith.addf %274, %275 : vector<2x128xf32>
    %277 = arith.negf %276 : vector<2x128xf32>
    %278 = math.exp %277 : vector<2x128xf32>
    %cst_71 = arith.constant 1.000000e+00 : f32
    %279 = vector.broadcast %cst_71 : f32 to vector<2x128xf32>
    %280 = arith.addf %279, %278 : vector<2x128xf32>
    %281 = arith.divf %279, %280 : vector<2x128xf32>
    %282 = math.tanh %276 : vector<2x128xf32>
    %283 = vector.extract_strided_slice %281 {offsets = [0, 0], sizes = [2, 32], strides = [1, 1]} : vector<2x128xf32> to vector<2x32xf32>
    %284 = vector.extract_strided_slice %281 {offsets = [0, 32], sizes = [2, 32], strides = [1, 1]} : vector<2x128xf32> to vector<2x32xf32>
    %285 = vector.extract_strided_slice %282 {offsets = [0, 64], sizes = [2, 32], strides = [1, 1]} : vector<2x128xf32> to vector<2x32xf32>
    %286 = vector.extract_strided_slice %281 {offsets = [0, 96], sizes = [2, 32], strides = [1, 1]} : vector<2x128xf32> to vector<2x32xf32>
    %287 = arith.mulf %284, %250 : vector<2x32xf32>
    %288 = arith.mulf %283, %285 : vector<2x32xf32>
    %289 = arith.addf %287, %288 : vector<2x32xf32>
    %290 = math.tanh %289 : vector<2x32xf32>
    %291 = arith.mulf %286, %290 : vector<2x32xf32>
    %c7 = arith.constant 7 : index
    %c0_72 = arith.constant 0 : index
    %c0_73 = arith.constant 0 : index
    %292 = vector.load %arg11[%c7, %c0_72, %c0_73] : memref<8x2x128xf32, #tpu.memory_space<vmem>>, vector<1x2x128xf32>
    %293 = vector.shape_cast %292 : vector<1x2x128xf32> to vector<2x128xf32>
    %cst_74 = arith.constant dense<0.000000e+00> : vector<2x128xf32>
    %294 = tpu.matmul %271, %2, %cst_74 {dimension_numbers = #tpu.dot_dimension_numbers<[1], [0], [0], [1], [0, 0, 1, 1], [], []>} : vector<2x32xf32>, vector<32x128xf32>, vector<2x128xf32> -> vector<2x128xf32>
    %295 = arith.addf %293, %294 : vector<2x128xf32>
    %296 = arith.negf %295 : vector<2x128xf32>
    %297 = math.exp %296 : vector<2x128xf32>
    %cst_75 = arith.constant 1.000000e+00 : f32
    %298 = vector.broadcast %cst_75 : f32 to vector<2x128xf32>
    %299 = arith.addf %298, %297 : vector<2x128xf32>
    %300 = arith.divf %298, %299 : vector<2x128xf32>
    %301 = math.tanh %295 : vector<2x128xf32>
    %302 = vector.extract_strided_slice %300 {offsets = [0, 0], sizes = [2, 32], strides = [1, 1]} : vector<2x128xf32> to vector<2x32xf32>
    %303 = vector.extract_strided_slice %300 {offsets = [0, 32], sizes = [2, 32], strides = [1, 1]} : vector<2x128xf32> to vector<2x32xf32>
    %304 = vector.extract_strided_slice %301 {offsets = [0, 64], sizes = [2, 32], strides = [1, 1]} : vector<2x128xf32> to vector<2x32xf32>
    %305 = vector.extract_strided_slice %300 {offsets = [0, 96], sizes = [2, 32], strides = [1, 1]} : vector<2x128xf32> to vector<2x32xf32>
    %306 = arith.mulf %303, %269 : vector<2x32xf32>
    %307 = arith.mulf %302, %304 : vector<2x32xf32>
    %308 = arith.addf %306, %307 : vector<2x32xf32>
    %309 = math.tanh %308 : vector<2x32xf32>
    %310 = arith.mulf %305, %309 : vector<2x32xf32>
    %cst_76 = arith.constant dense<0.000000e+00> : vector<2x128xf32>
    %311 = tpu.matmul %310, %1, %cst_76 {dimension_numbers = #tpu.dot_dimension_numbers<[1], [0], [0], [1], [0, 0, 1, 1], [], []>} : vector<2x32xf32>, vector<32x128xf32>, vector<2x128xf32> -> vector<2x128xf32>
    %312 = vector.broadcast %5 : vector<1x128xf32> to vector<2x128xf32>
    %313 = arith.addf %312, %311 : vector<2x128xf32>
    %cst_77 = arith.constant dense<0.000000e+00> : vector<2x128xf32>
    %314 = tpu.matmul %291, %3, %cst_77 {dimension_numbers = #tpu.dot_dimension_numbers<[1], [0], [0], [1], [0, 0, 1, 1], [], []>} : vector<2x32xf32>, vector<32x128xf32>, vector<2x128xf32> -> vector<2x128xf32>
    %315 = arith.addf %313, %314 : vector<2x128xf32>
    %316 = arith.negf %315 : vector<2x128xf32>
    %317 = math.exp %316 : vector<2x128xf32>
    %cst_78 = arith.constant 1.000000e+00 : f32
    %318 = vector.broadcast %cst_78 : f32 to vector<2x128xf32>
    %319 = arith.addf %318, %317 : vector<2x128xf32>
    %320 = arith.divf %318, %319 : vector<2x128xf32>
    %321 = math.tanh %315 : vector<2x128xf32>
    %322 = vector.extract_strided_slice %320 {offsets = [0, 0], sizes = [2, 32], strides = [1, 1]} : vector<2x128xf32> to vector<2x32xf32>
    %323 = vector.extract_strided_slice %320 {offsets = [0, 32], sizes = [2, 32], strides = [1, 1]} : vector<2x128xf32> to vector<2x32xf32>
    %324 = vector.extract_strided_slice %321 {offsets = [0, 64], sizes = [2, 32], strides = [1, 1]} : vector<2x128xf32> to vector<2x32xf32>
    %325 = vector.extract_strided_slice %320 {offsets = [0, 96], sizes = [2, 32], strides = [1, 1]} : vector<2x128xf32> to vector<2x32xf32>
    %326 = arith.mulf %323, %289 : vector<2x32xf32>
    %327 = arith.mulf %322, %324 : vector<2x32xf32>
    %328 = arith.addf %326, %327 : vector<2x32xf32>
    %329 = math.tanh %328 : vector<2x32xf32>
    %330 = arith.mulf %325, %329 : vector<2x32xf32>
    %c0_79 = arith.constant 0 : index
    %c0_80 = arith.constant 0 : index
    %331 = vector.load %arg8[%c0_79, %c0_80] : memref<32x128xf32, #tpu.memory_space<vmem>>, vector<32x128xf32>
    %cst_81 = arith.constant dense<0.000000e+00> : vector<2x128xf32>
    %332 = tpu.matmul %330, %331, %cst_81 {dimension_numbers = #tpu.dot_dimension_numbers<[1], [0], [0], [1], [0, 0, 1, 1], [], []>} : vector<2x32xf32>, vector<32x128xf32>, vector<2x128xf32> -> vector<2x128xf32>
    %c0_82 = arith.constant 0 : index
    %c0_83 = arith.constant 0 : index
    %333 = vector.load %arg9[%c0_82, %c0_83] : memref<1x128xf32, #tpu.memory_space<vmem>>, vector<1x128xf32>
    %334 = vector.broadcast %333 : vector<1x128xf32> to vector<2x128xf32>
    %335 = arith.addf %332, %334 : vector<2x128xf32>
    %c0_84 = arith.constant 0 : index
    %c0_85 = arith.constant 0 : index
    %c0_86 = arith.constant 0 : index
    %336 = vector.load %arg10[%c0_84, %c0_85, %c0_86] : memref<1x2x128xf32, #tpu.memory_space<vmem>>, vector<1x2x128xf32>
    %337 = vector.shape_cast %336 : vector<1x2x128xf32> to vector<2x128xf32>
    %338 = vector.shape_cast %335 : vector<2x128xf32> to vector<1x2x128xf32>
    tpu.vector_store %arg10[%c0_84, %c0_85, %c0_86], %338 {strides = array<i32>} : memref<1x2x128xf32, #tpu.memory_space<vmem>>, vector<1x2x128xf32>,
    return
  }
  func.func @transform_0(%arg0: i32) -> (i32, i32, i32, i32) {
    %c0_i32 = arith.constant 0 : i32
    %c0_i32_0 = arith.constant 0 : i32
    %c0_i32_1 = arith.constant 0 : i32
    %c0_i32_2 = arith.constant 0 : i32
    return %arg0, %c0_i32, %c0_i32_0, %c0_i32_1 : i32, i32, i32, i32
  }
  func.func @transform_1(%arg0: i32) -> (i32, i32) {
    %c0_i32 = arith.constant 0 : i32
    %c0_i32_0 = arith.constant 0 : i32
    %c0_i32_1 = arith.constant 0 : i32
    return %c0_i32, %c0_i32_0 : i32, i32
  }
  func.func @transform_2(%arg0: i32) -> (i32, i32) {
    %c0_i32 = arith.constant 0 : i32
    %c0_i32_0 = arith.constant 0 : i32
    %c0_i32_1 = arith.constant 0 : i32
    return %c0_i32, %c0_i32_0 : i32, i32
  }
  func.func @transform_3(%arg0: i32) -> (i32, i32) {
    %c0_i32 = arith.constant 0 : i32
    %c0_i32_0 = arith.constant 0 : i32
    %c0_i32_1 = arith.constant 0 : i32
    return %c0_i32, %c0_i32_0 : i32, i32
  }
  func.func @transform_4(%arg0: i32) -> (i32, i32) {
    %c0_i32 = arith.constant 0 : i32
    %c0_i32_0 = arith.constant 0 : i32
    %c0_i32_1 = arith.constant 0 : i32
    return %c0_i32, %c0_i32_0 : i32, i32
  }
  func.func @transform_5(%arg0: i32) -> (i32, i32) {
    %c0_i32 = arith.constant 0 : i32
    %c0_i32_0 = arith.constant 0 : i32
    %c0_i32_1 = arith.constant 0 : i32
    return %c0_i32, %c0_i32_0 : i32, i32
  }
  func.func @transform_6(%arg0: i32) -> (i32, i32) {
    %c0_i32 = arith.constant 0 : i32
    %c0_i32_0 = arith.constant 0 : i32
    %c0_i32_1 = arith.constant 0 : i32
    return %c0_i32, %c0_i32_0 : i32, i32
  }
  func.func @transform_7(%arg0: i32) -> (i32, i32) {
    %c0_i32 = arith.constant 0 : i32
    %c0_i32_0 = arith.constant 0 : i32
    %c0_i32_1 = arith.constant 0 : i32
    return %c0_i32, %c0_i32_0 : i32, i32
  }
  func.func @transform_8(%arg0: i32) -> (i32, i32) {
    %c0_i32 = arith.constant 0 : i32
    %c0_i32_0 = arith.constant 0 : i32
    %c0_i32_1 = arith.constant 0 : i32
    return %c0_i32, %c0_i32_0 : i32, i32
  }
  func.func @transform_9(%arg0: i32) -> (i32, i32, i32) {
    %c0_i32 = arith.constant 0 : i32
    %c0_i32_0 = arith.constant 0 : i32
    %c0_i32_1 = arith.constant 0 : i32
    return %arg0, %c0_i32, %c0_i32_0 : i32, i32, i32
  }
}

</mosaic_0001>

<llo_original>
// kernel: _lstm_forward.1
$region0: #{_lstm_forward.1}
  #allocation0 [shape = 'u32[]', space=smem, size = 0x4, offset = 0x4, fixed_abs, tag = 'smem constant byte address 0x4 - core index']
  #allocation1 [shape = 'u32[72,128]{1,0:T(1,128)}', space=vmem, size = 0x9000, scoped, tag = 'internal scratch']
  #allocation2 [shape = 'f32[8,2,128]{2,1,0:T(2,128)}', space=vmem, size = 0x2000, scoped, tag = 'scratch operand']
  %s0 = inlined_call_operand.hbm [shape: f32[1,2,8,16], index: 0, kind: input, shape index: {}]
  %s1 = inlined_call_operand.hbm [shape: f32[16,128], index: 1, kind: input, shape index: {}]
  %s2 = inlined_call_operand.vmem [shape: f32[32,128], index: 2, kind: input, shape index: {}]
  %s3 = inlined_call_operand.vmem [shape: f32[1,128], index: 3, kind: input, shape index: {}]
  %s4 = inlined_call_operand.vmem [shape: f32[32,128], index: 4, kind: input, shape index: {}]
  %s5 = inlined_call_operand.vmem [shape: f32[32,128], index: 5, kind: input, shape index: {}]
  %s6 = inlined_call_operand.vmem [shape: f32[1,128], index: 6, kind: input, shape index: {}]
  %s7 = inlined_call_operand.vmem [shape: f32[32,128], index: 7, kind: input, shape index: {}]
  %s8 = inlined_call_operand.vmem [shape: f32[1,128], index: 8, kind: input, shape index: {}]
  %s9 = inlined_call_operand.hbm [shape: f32[1,2,128], index: 9, kind: output, shape index: {}]
  %s10 = sld [smem:[#allocation0]]
  $region54: #{_lstm_forward.1} parent=0
    _
  %s12 = ssub.s32 1, %s10
  %s13 = scalar_select 0, %s12, %s10
  $region1: #{_lstm_forward.1} parent=0
    #allocation3 [shape = 'u8[8192]{0}', space=vmem, size = 0x2000, scoped, tag = 'input window, operand 0, single buffered']
    #allocation4 [shape = 's32[1]{0}', space=sflag, size = 0x4, scoped, tag = 'scoped memory for _lstm_forward.1']
    #allocation5 [shape = 's32[1]{0}', space=sflag, size = 0x4, scoped, tag = 'scoped memory for _lstm_forward.1']
    #allocation6 [shape = 'u8[8192]{0}', space=vmem, size = 0x2000, scoped, tag = 'input window, operand 1, single buffered']
    #allocation7 [shape = 's32[1]{0}', space=sflag, size = 0x4, scoped, tag = 'scoped memory for _lstm_forward.1']
    #allocation8 [shape = 'u8[1024]{0}', space=vmem, size = 0x400, scoped, tag = 'output window, operand 0, single buffered']
    %14 = vsyncpa [#allocation4], 0
    %15 = vsyncpa [#allocation7], 0
    %16 = vsyncpa [#allocation5], 0
    // Predicated region
    $region2: #{_lstm_forward.1} parent=1 // pred_check
      _
    $region3: #{_lstm_forward.1} parent=1 // pred_check_branch
      %18 = sbr.rel (0) target = $region5
    $region4: #{_lstm_forward.1} parent=1 // pred_region
      %20 = vsyncadd [#allocation4], 0
      %s21 = sshll.u32 %s0, 4
      %s22 = int_to_ptr.hbm [resolvable:$true] %s21
      %s23 = sshll.u32 [#allocation3], 4
      %s24 = int_to_ptr.vmem [resolvable:$true] %s23
      %29 = dma.hbm_to_vmem [thread:$0]  %s22, 256, %s24, [#allocation4], 128, 128, 8
    $region5: #{_lstm_forward.1} parent=1 // pred_fallthru
      _
    // Predicated region
    $region6: #{_lstm_forward.1} parent=1 // pred_check
      _
    $region7: #{_lstm_forward.1} parent=1 // pred_check_branch
      %31 = sbr.rel (0) target = $region9
    $region8: #{_lstm_forward.1} parent=1 // pred_region
      %33 = vsyncadd [#allocation7], 0
      %s34 = sshll.u32 %s1, 4
      %s35 = int_to_ptr.hbm [resolvable:$true] %s34
      %s36 = sshll.u32 [#allocation6], 4
      %s37 = int_to_ptr.vmem [resolvable:$true] %s36
      %42 = dma.hbm_to_vmem [thread:$0]  %s35, 256, %s37, [#allocation7], 128, 128, 8
    $region9: #{_lstm_forward.1} parent=1 // pred_fallthru
      _
    // Predicated region
    $region10: #{_lstm_forward.1} parent=1 // pred_check
      _
    $region11: #{_lstm_forward.1} parent=1 // pred_check_branch
      %44 = sbr.rel (0) target = $region13
    $region12: #{_lstm_forward.1} parent=1 // pred_region
      _
    $region13: #{_lstm_forward.1} parent=1 // pred_fallthru
      _
    // Predicated region
    $region14: #{_lstm_forward.1} parent=1 // pred_check
      _
    $region15: #{_lstm_forward.1} parent=1 // pred_check_branch
      %46 = sbr.rel (0) target = $region17
    $region16: #{_lstm_forward.1} parent=1 // pred_region
      _
    $region17: #{_lstm_forward.1} parent=1 // pred_fallthru
      _
    // Predicated region
    $region18: #{_lstm_forward.1} parent=1 // pred_check
      _
    $region19: #{_lstm_forward.1} parent=1 // pred_check_branch
      %48 = sbr.rel (0) target = $region21
    $region20: #{_lstm_forward.1} parent=1 // pred_region
      _
    $region21: #{_lstm_forward.1} parent=1 // pred_fallthru
      _
    // Predicated region
    $region22: #{_lstm_forward.1} parent=1 // pred_check
      _
    $region23: #{_lstm_forward.1} parent=1 // pred_check_branch
      %50 = sbr.rel (0) target = $region25
    $region24: #{_lstm_forward.1} parent=1 // pred_region
      _
    $region25: #{_lstm_forward.1} parent=1 // pred_fallthru
      _
    // Predicated region
    $region26: #{_lstm_forward.1} parent=1 // pred_check
      _
    $region27: #{_lstm_forward.1} parent=1 // pred_check_branch
      %52 = sbr.rel (0) target = $region29
    $region28: #{_lstm_forward.1} parent=1 // pred_region
      _
    $region29: #{_lstm_forward.1} parent=1 // pred_fallthru
      _
    // Predicated region
    $region30: #{_lstm_forward.1} parent=1 // pred_check
      _
    $region31: #{_lstm_forward.1} parent=1 // pred_check_branch
      %54 = sbr.rel (0) target = $region33
    $region32: #{_lstm_forward.1} parent=1 // pred_region
      _
    $region33: #{_lstm_forward.1} parent=1 // pred_fallthru
      _
    // Predicated region
    $region34: #{_lstm_forward.1} parent=1 // pred_check
      _
    $region35: #{_lstm_forward.1} parent=1 // pred_check_branch
      %56 = sbr.rel (0) target = $region37
    $region36: #{_lstm_forward.1} parent=1 // pred_region
      _
    $region37: #{_lstm_forward.1} parent=1 // pred_fallthru
      _
    // Predicated region
    $region38: #{_lstm_forward.1} parent=1 // pred_check
      _
    $region39: #{_lstm_forward.1} parent=1 // pred_check_branch
      %58 = sbr.rel (0) target = $region41
    $region40: #{_lstm_forward.1} parent=1 // pred_region
      %60 = dma.done [#allocation4], 256
    $region41: #{_lstm_forward.1} parent=1 // pred_fallthru
      _
    // Predicated region
    $region42: #{_lstm_forward.1} parent=1 // pred_check
      _
    $region43: #{_lstm_forward.1} parent=1 // pred_check_branch
      %62 = sbr.rel (0) target = $region45
    $region44: #{_lstm_forward.1} parent=1 // pred_region
      %64 = dma.done [#allocation7], 256
    $region45: #{_lstm_forward.1} parent=1 // pred_fallthru
      _
    %v65 = vld [vmem:[#allocation6] sm:$0xff]
    %v66 = vld [vmem:[#allocation6 + $0x8] sm:$0xff]
    %v67 = vld [vmem:[%s4] sm:$0xff]
    %v68 = vld [vmem:[%s4 + $0x8] sm:$0xff]
    %v69 = vld [vmem:[%s4 + $0x10] sm:$0xff]
    %v70 = vld [vmem:[%s4 + $0x18] sm:$0xff]
    %v71 = vld [vmem:[%s2] sm:$0xff]
    %v72 = vld [vmem:[%s2 + $0x8] sm:$0xff]
    %v73 = vld [vmem:[%s2 + $0x10] sm:$0xff]
    %v74 = vld [vmem:[%s2 + $0x18] sm:$0xff]
    %v75 = vld [vmem:[%s5] sm:$0xff]
    %v76 = vld [vmem:[%s5 + $0x8] sm:$0xff]
    %v77 = vld [vmem:[%s5 + $0x10] sm:$0xff]
    %v78 = vld [vmem:[%s5 + $0x18] sm:$0xff]
    %v79 = vld [vmem:[%s3] sm:$0x1]
    %v80 = vld [vmem:[%s6] sm:$0x1]
    %v81 = vld [vmem:[#allocation3] sm:$0xff]
    %v82 = vld [vmem:[#allocation3 + $0x8] sm:$0xff]
    %v83 = vrot.slane %v81, 4
    %vm84 = vcmask 1047556
    %v85 = vsel %vm84, 0.0, %v83
    %v87 = vunpack.c.l.s4 1983009808
    %v88 = vunpack.c.0.s8 %v87
    %v89 = vperm.slane %v81, %v88
    %v91 = vunpack.c.l.s4 1983009808
    %v92 = vunpack.c.0.s8 %v91
    %v93 = vperm.slane %v85, %v92
    %v94 = vrot.slane %v82, 4
    %v95 = vsel %vm84, 0.0, %v94
    %v97 = vunpack.c.l.s4 1983009808
    %v98 = vunpack.c.0.s8 %v97
    %v99 = vperm.slane %v82, %v98
    %v101 = vunpack.c.l.s4 1983009808
    %v102 = vunpack.c.0.s8 %v101
    %v103 = vperm.slane %v95, %v102
    %v104 = vrot.slane %v99, 4
    %v105 = vsel %vm84, %v104, %v89
    %v106 = vrot.slane %v89, 4
    %v107 = vsel %vm84, %v99, %v106
    %v109 = vunpack.c.l.s4 1934713408
    %v110 = vunpack.c.0.s8 %v109
    %v111 = vperm.slane %v105, %v110
    %v113 = vunpack.c.l.s4 1934713408
    %v114 = vunpack.c.0.s8 %v113
    %v115 = vperm.slane %v107, %v114
    %v116 = vrot.slane %v103, 4
    %v117 = vsel %vm84, %v116, %v93
    %v118 = vrot.slane %v93, 4
    %v119 = vsel %vm84, %v103, %v118
    %v121 = vunpack.c.l.s4 1934713408
    %v122 = vunpack.c.0.s8 %v121
    %v123 = vperm.slane %v117, %v122
    %v125 = vunpack.c.l.s4 1934713408
    %v126 = vunpack.c.0.s8 %v125
    %v127 = vperm.slane %v119, %v126
    %v128 = vrot.slane %v111, 4
    %v129 = vsel %vm84, 0.0, %v128
    %v130 = vrot.slane %v115, 4
    %v131 = vsel %vm84, 0.0, %v130
    %v132 = vrot.slane %v123, 4
    %v133 = vsel %vm84, 0.0, %v132
    %v134 = vrot.slane %v127, 4
    %v135 = vsel %vm84, 0.0, %v134
    %v137 = vperm.slane %v79, 0
    %147 = vst [vmem:[#allocation1] ss:$4 sm:$0xff] %v111
    %s148 = scalar_lea.vmem [#allocation1], 1
    %149 = vst [vmem:[%s148] ss:$4 sm:$0xff] %v129
    %s150 = scalar_lea.vmem [#allocation1], 2
    %151 = vst [vmem:[%s150] ss:$4 sm:$0xff] %v115
    %s152 = scalar_lea.vmem [#allocation1], 3
    %153 = vst [vmem:[%s152] ss:$4 sm:$0xff] %v131
    %s154 = scalar_lea.vmem [#allocation1], 32
    %155 = vst [vmem:[%s154] ss:$4 sm:$0xff] %v123
    %s156 = scalar_lea.vmem [#allocation1], 33
    %157 = vst [vmem:[%s156] ss:$4 sm:$0xff] %v133
    %s158 = scalar_lea.vmem [#allocation1], 34
    %159 = vst [vmem:[%s158] ss:$4 sm:$0xff] %v127
    %s160 = scalar_lea.vmem [#allocation1], 35
    %161 = vst [vmem:[%s160] ss:$4 sm:$0xff] %v135
    %v162 = vld.sshfl [vmem:[#allocation1] sm:$0xff pattern:$0x73625140]
    %v163 = vld.sshfl [vmem:[#allocation1 + $0x20] sm:$0xff pattern:$0x73625140]
    %vm164 = vcmask 130048
    %v165 = vsel %vm164, %v162, 0
    %v167 = vsel %vm164, %v163, 0
    %169 = vmatpush.msra.mxu0 0.0
    %170 = vmatpush.msra.mxu0 0.0
    %171 = vmatpush.msra.mxu0 0.0
    %172 = vmatpush.msra.mxu0 0.0
    %173 = vmatpush.msra.mxu0 0.0
    %174 = vmatpush.msra.mxu0 0.0
    %175 = vmatpush.msra.mxu0 0.0
    %176 = vmatpush.msra.mxu0 0.0
    %177 = vmatpush.msra.mxu0 0.0
    %178 = vmatpush.msra.mxu0 0.0
    %179 = vmatpush.msra.mxu0 0.0
    %180 = vmatpush.msra.mxu0 0.0
    %181 = vmatpush.msra.mxu0 0.0
    %182 = vmatpush.msra.mxu0 0.0
    %183 = vmatpush.msra.mxu0 %v66
    %184 = vmatpush.msra.mxu0 %v65
    %185 = vmatmul.f32.gmra.mxu0 %v165
    %v186 = vpop.f32.mrf.mxu0
    %v187 = vadd.f32 %v137, %v186
    %188 = vmatmul.f32.gmra.mxu0 %v167
    %v189 = vpop.f32.mrf.mxu0
    %v190 = vadd.f32 %v137, %v189
    %191 = vdwg.mxu0
    %v194 = vrot.slane %v187, 2
    %v195 = vrot.slane %v187, 4
    %v196 = vrot.slane %v187, 6
    %v197 = vrot.slane %v190, 2
    %v198 = vrot.slane %v190, 4
    %v199 = vrot.slane %v190, 6
    %206 = vst [vmem:[#allocation2] sm:$0x3] %v187
    %207 = vst [vmem:[#allocation2 + $0x2] sm:$0x3] %v194
    %208 = vst [vmem:[#allocation2 + $0x4] sm:$0x3] %v195
    %209 = vst [vmem:[#allocation2 + $0x6] sm:$0x3] %v196
    %210 = vst [vmem:[#allocation2 + $0x8] sm:$0x3] %v190
    %211 = vst [vmem:[#allocation2 + $0xa] sm:$0x3] %v197
    %212 = vst [vmem:[#allocation2 + $0xc] sm:$0x3] %v198
    %213 = vst [vmem:[#allocation2 + $0xe] sm:$0x3] %v199
    %v214 = vld [vmem:[#allocation2] sm:$0x3]
    %vm215 = vcmask 261120
    %v217 = vsel %vm215, 0.0, 0
    %219 = vmatpush.msra.mxu0 0.0
    %220 = vmatpush.msra.mxu0 0.0
    %221 = vmatpush.msra.mxu0 0.0
    %222 = vmatpush.msra.mxu0 0.0
    %223 = vmatpush.msra.mxu0 0.0
    %224 = vmatpush.msra.mxu0 0.0
    %225 = vmatpush.msra.mxu0 0.0
    %226 = vmatpush.msra.mxu0 0.0
    %227 = vmatpush.msra.mxu0 0.0
    %228 = vmatpush.msra.mxu0 0.0
    %229 = vmatpush.msra.mxu0 0.0
    %230 = vmatpush.msra.mxu0 0.0
    %231 = vmatpush.msra.mxu0 %v74
    %232 = vmatpush.msra.mxu0 %v73
    %233 = vmatpush.msra.mxu0 %v72
    %234 = vmatpush.msra.mxu0 %v71
    %235 = vmatmul.f32.gmra.mxu0 %v217
    %v236 = vpop.f32.mrf.mxu0
    %v237 = vadd.f32 0.0, %v236
    %238 = vdwg.mxu0
    %v239 = vadd.f32 %v214, %v237
    %v240 = vxor.u32 %v239, 2147483648
    %v241 = vmul.f32 %v240, 1.442695
    %v242 = vpow.pop %v241
    %v243 = vadd.f32 %v242, 1.0
    %v244 = vrcp.pop %v243
    %v245 = vmul.f32 %v243, %v244
    %v246 = vsub.f32 1.0, %v245
    %v247 = vmul.f32 %v244, %v246
    %v248 = vadd.f32 %v244, %v247
    %vm249 = vweird.f32 %v243
    %vm250 = vweird.f32 %v244
    %vm251 = vmor %vm249, %vm250
    %v252 = vsel %vm251, %v244, %v248
    %v253 = vand.u32 2147483647, %v243
    %vm254 = vcmp.eq.f32.partialorder %v253, 8.507059e+37
    %v255 = vand.u32 %v243, 2147483648
    %v256 = vor.u32 1.1754944e-38, %v255
    %v257 = vsel %vm254, %v256, %v252
    %v258 = vmul.f32 1.0, %v257
    %v259 = vtanh.pop %v239
    %v260 = vmul.f32 %v258, 0.0
    %262 = vrot.lane.b32.xlu0 %v259, 64
    %v263 = vpop.permute.xlu0 %262
    %v265 = vmul.f32 %v258, %v263
    %267 = vrot.lane.b32.xlu0 %v265, 32
    %v268 = vpop.permute.xlu0 %267
    %v270 = vadd.f32 %v260, %v268
    %v271 = vtanh.pop %v270
    %273 = vrot.lane.b32.xlu0 %v271, 64
    %v274 = vpop.permute.xlu0 %273
    %v276 = vmul.f32 %v258, %v274
    %278 = vrot.lane.b32.xlu0 %v276, 32
    %v279 = vpop.permute.xlu0 %278
    %v280 = vsel %vm215, %v279, 0
    %282 = vmatpush.msra.mxu0 0.0
    %283 = vmatpush.msra.mxu0 0.0
    %284 = vmatpush.msra.mxu0 0.0
    %285 = vmatpush.msra.mxu0 0.0
    %286 = vmatpush.msra.mxu0 0.0
    %287 = vmatpush.msra.mxu0 0.0
    %288 = vmatpush.msra.mxu0 0.0
    %289 = vmatpush.msra.mxu0 0.0
    %290 = vmatpush.msra.mxu0 0.0
    %291 = vmatpush.msra.mxu0 0.0
    %292 = vmatpush.msra.mxu0 0.0
    %293 = vmatpush.msra.mxu0 0.0
    %294 = vmatpush.msra.mxu0 %v70
    %295 = vmatpush.msra.mxu0 %v69
    %296 = vmatpush.msra.mxu0 %v68
    %297 = vmatpush.msra.mxu0 %v67
    %298 = vmatmul.f32.gmra.mxu0 %v280
    %v299 = vpop.f32.mrf.mxu0
    %v300 = vadd.f32 0.0, %v299
    %301 = vdwg.mxu0
    %v303 = vperm.slane %v80, 0
    %v305 = vadd.f32 %v303, %v300
    %306 = vmatpush.msra.mxu0 0.0
    %307 = vmatpush.msra.mxu0 0.0
    %308 = vmatpush.msra.mxu0 0.0
    %309 = vmatpush.msra.mxu0 0.0
    %310 = vmatpush.msra.mxu0 0.0
    %311 = vmatpush.msra.mxu0 0.0
    %312 = vmatpush.msra.mxu0 0.0
    %313 = vmatpush.msra.mxu0 0.0
    %314 = vmatpush.msra.mxu0 0.0
    %315 = vmatpush.msra.mxu0 0.0
    %316 = vmatpush.msra.mxu0 0.0
    %317 = vmatpush.msra.mxu0 0.0
    %318 = vmatpush.msra.mxu0 %v78
    %319 = vmatpush.msra.mxu0 %v77
    %320 = vmatpush.msra.mxu0 %v76
    %321 = vmatpush.msra.mxu0 %v75
    %322 = vmatmul.f32.gmra.mxu0 %v217
    %v323 = vpop.f32.mrf.mxu0
    %v324 = vadd.f32 0.0, %v323
    %325 = vdwg.mxu0
    %v326 = vadd.f32 %v305, %v324
    %v327 = vxor.u32 %v326, 2147483648
    %v328 = vmul.f32 %v327, 1.442695
    %v329 = vpow.pop %v328
    %v330 = vadd.f32 %v329, 1.0
    %v331 = vrcp.pop %v330
    %v332 = vmul.f32 %v330, %v331
    %v333 = vsub.f32 1.0, %v332
    %v334 = vmul.f32 %v331, %v333
    %v335 = vadd.f32 %v331, %v334
    %vm336 = vweird.f32 %v330
    %vm337 = vweird.f32 %v331
    %vm338 = vmor %vm336, %vm337
    %v339 = vsel %vm338, %v331, %v335
    %v340 = vand.u32 2147483647, %v330
    %vm341 = vcmp.eq.f32.partialorder %v340, 8.507059e+37
    %v342 = vand.u32 %v330, 2147483648
    %v343 = vor.u32 1.1754944e-38, %v342
    %v344 = vsel %vm341, %v343, %v339
    %v345 = vmul.f32 1.0, %v344
    %v346 = vtanh.pop %v326
    %v347 = vmul.f32 %v345, 0.0
    %349 = vrot.lane.b32.xlu0 %v346, 64
    %v350 = vpop.permute.xlu0 %349
    %v352 = vmul.f32 %v345, %v350
    %354 = vrot.lane.b32.xlu0 %v352, 32
    %v355 = vpop.permute.xlu0 %354
    %v357 = vadd.f32 %v347, %v355
    %v358 = vtanh.pop %v357
    %360 = vrot.lane.b32.xlu0 %v358, 64
    %v361 = vpop.permute.xlu0 %360
    %v363 = vmul.f32 %v345, %v361
    %s364 = scalar_lea.vmem [#allocation2], 2
    %v365 = vld [vmem:[%s364] sm:$0x3]
    %366 = vmatpush.msra.mxu0 0.0
    %367 = vmatpush.msra.mxu0 0.0
    %368 = vmatpush.msra.mxu0 0.0
    %369 = vmatpush.msra.mxu0 0.0
    %370 = vmatpush.msra.mxu0 0.0
    %371 = vmatpush.msra.mxu0 0.0
    %372 = vmatpush.msra.mxu0 0.0
    %373 = vmatpush.msra.mxu0 0.0
    %374 = vmatpush.msra.mxu0 0.0
    %375 = vmatpush.msra.mxu0 0.0
    %376 = vmatpush.msra.mxu0 0.0
    %377 = vmatpush.msra.mxu0 0.0
    %378 = vmatpush.msra.mxu0 %v74
    %379 = vmatpush.msra.mxu0 %v73
    %380 = vmatpush.msra.mxu0 %v72
    %381 = vmatpush.msra.mxu0 %v71
    %382 = vmatmul.f32.gmra.mxu0 %v280
    %v383 = vpop.f32.mrf.mxu0
    %v384 = vadd.f32 0.0, %v383
    %385 = vdwg.mxu0
    %v386 = vadd.f32 %v365, %v384
    %v387 = vxor.u32 %v386, 2147483648
    %v388 = vmul.f32 %v387, 1.442695
    %v389 = vpow.pop %v388
    %v390 = vadd.f32 %v389, 1.0
    %v391 = vrcp.pop %v390
    %v392 = vmul.f32 %v390, %v391
    %v393 = vsub.f32 1.0, %v392
    %v394 = vmul.f32 %v391, %v393
    %v395 = vadd.f32 %v391, %v394
    %vm396 = vweird.f32 %v390
    %vm397 = vweird.f32 %v391
    %vm398 = vmor %vm396, %vm397
    %v399 = vsel %vm398, %v391, %v395
    %v400 = vand.u32 2147483647, %v390
    %vm401 = vcmp.eq.f32.partialorder %v400, 8.507059e+37
    %v402 = vand.u32 %v390, 2147483648
    %v403 = vor.u32 1.1754944e-38, %v402
    %v404 = vsel %vm401, %v403, %v399
    %v405 = vmul.f32 1.0, %v404
    %v406 = vtanh.pop %v386
    %v407 = vmul.f32 %v405, %v270
    %409 = vrot.lane.b32.xlu0 %v406, 64
    %v410 = vpop.permute.xlu0 %409
    %v412 = vmul.f32 %v405, %v410
    %414 = vrot.lane.b32.xlu0 %v412, 32
    %v415 = vpop.permute.xlu0 %414
    %v417 = vadd.f32 %v407, %v415
    %v418 = vtanh.pop %v417
    %420 = vrot.lane.b32.xlu0 %v418, 64
    %v421 = vpop.permute.xlu0 %420
    %v423 = vmul.f32 %v405, %v421
    %425 = vrot.lane.b32.xlu0 %v423, 32
    %v426 = vpop.permute.xlu0 %425
    %v427 = vsel %vm215, %v426, 0
    %429 = vmatpush.msra.mxu0 0.0
    %430 = vmatpush.msra.mxu0 0.0
    %431 = vmatpush.msra.mxu0 0.0
    %432 = vmatpush.msra.mxu0 0.0
    %433 = vmatpush.msra.mxu0 0.0
    %434 = vmatpush.msra.mxu0 0.0
    %435 = vmatpush.msra.mxu0 0.0
    %436 = vmatpush.msra.mxu0 0.0
    %437 = vmatpush.msra.mxu0 0.0
    %438 = vmatpush.msra.mxu0 0.0
    %439 = vmatpush.msra.mxu0 0.0
    %440 = vmatpush.msra.mxu0 0.0
    %441 = vmatpush.msra.mxu0 %v70
    %442 = vmatpush.msra.mxu0 %v69
    %443 = vmatpush.msra.mxu0 %v68
    %444 = vmatpush.msra.mxu0 %v67
    %445 = vmatmul.f32.gmra.mxu0 %v427
    %v446 = vpop.f32.mrf.mxu0
    %v447 = vadd.f32 0.0, %v446
    %448 = vdwg.mxu0
    %v449 = vadd.f32 %v303, %v447
    %451 = vrot.lane.b32.xlu0 %v363, 32
    %v452 = vpop.permute.xlu0 %451
    %v453 = vsel %vm215, %v452, 0
    %455 = vmatpush.msra.mxu0 0.0
    %456 = vmatpush.msra.mxu0 0.0
    %457 = vmatpush.msra.mxu0 0.0
    %458 = vmatpush.msra.mxu0 0.0
    %459 = vmatpush.msra.mxu0 0.0
    %460 = vmatpush.msra.mxu0 0.0
    %461 = vmatpush.msra.mxu0 0.0
    %462 = vmatpush.msra.mxu0 0.0
    %463 = vmatpush.msra.mxu0 0.0
    %464 = vmatpush.msra.mxu0 0.0
    %465 = vmatpush.msra.mxu0 0.0
    %466 = vmatpush.msra.mxu0 0.0
    %467 = vmatpush.msra.mxu0 %v78
    %468 = vmatpush.msra.mxu0 %v77
    %469 = vmatpush.msra.mxu0 %v76
    %470 = vmatpush.msra.mxu0 %v75
    %471 = vmatmul.f32.gmra.mxu0 %v453
    %v472 = vpop.f32.mrf.mxu0
    %v473 = vadd.f32 0.0, %v472
    %474 = vdwg.mxu0
    %v475 = vadd.f32 %v449, %v473
    %v476 = vxor.u32 %v475, 2147483648
    %v477 = vmul.f32 %v476, 1.442695
    %v478 = vpow.pop %v477
    %v479 = vadd.f32 %v478, 1.0
    %v480 = vrcp.pop %v479
    %v481 = vmul.f32 %v479, %v480
    %v482 = vsub.f32 1.0, %v481
    %v483 = vmul.f32 %v480, %v482
    %v484 = vadd.f32 %v480, %v483
    %vm485 = vweird.f32 %v479
    %vm486 = vweird.f32 %v480
    %vm487 = vmor %vm485, %vm486
    %v488 = vsel %vm487, %v480, %v484
    %v489 = vand.u32 2147483647, %v479
    %vm490 = vcmp.eq.f32.partialorder %v489, 8.507059e+37
    %v491 = vand.u32 %v479, 2147483648
    %v492 = vor.u32 1.1754944e-38, %v491
    %v493 = vsel %vm490, %v492, %v488
    %v494 = vmul.f32 1.0, %v493
    %v495 = vtanh.pop %v475
    %v496 = vmul.f32 %v494, %v357
    %498 = vrot.lane.b32.xlu0 %v495, 64
    %v499 = vpop.permute.xlu0 %498
    %v501 = vmul.f32 %v494, %v499
    %503 = vrot.lane.b32.xlu0 %v501, 32
    %v504 = vpop.permute.xlu0 %503
    %v506 = vadd.f32 %v496, %v504
    %v507 = vtanh.pop %v506
    %509 = vrot.lane.b32.xlu0 %v507, 64
    %v510 = vpop.permute.xlu0 %509
    %v512 = vmul.f32 %v494, %v510
    %s513 = scalar_lea.vmem [#allocation2], 4
    %v514 = vld [vmem:[%s513] sm:$0x3]
    %515 = vmatpush.msra.mxu0 0.0
    %516 = vmatpush.msra.mxu0 0.0
    %517 = vmatpush.msra.mxu0 0.0
    %518 = vmatpush.msra.mxu0 0.0
    %519 = vmatpush.msra.mxu0 0.0
    %520 = vmatpush.msra.mxu0 0.0
    %521 = vmatpush.msra.mxu0 0.0
    %522 = vmatpush.msra.mxu0 0.0
    %523 = vmatpush.msra.mxu0 0.0
    %524 = vmatpush.msra.mxu0 0.0
    %525 = vmatpush.msra.mxu0 0.0
    %526 = vmatpush.msra.mxu0 0.0
    %527 = vmatpush.msra.mxu0 %v74
    %528 = vmatpush.msra.mxu0 %v73
    %529 = vmatpush.msra.mxu0 %v72
    %530 = vmatpush.msra.mxu0 %v71
    %531 = vmatmul.f32.gmra.mxu0 %v427
    %v532 = vpop.f32.mrf.mxu0
    %v533 = vadd.f32 0.0, %v532
    %534 = vdwg.mxu0
    %v535 = vadd.f32 %v514, %v533
    %v536 = vxor.u32 %v535, 2147483648
    %v537 = vmul.f32 %v536, 1.442695
    %v538 = vpow.pop %v537
    %v539 = vadd.f32 %v538, 1.0
    %v540 = vrcp.pop %v539
    %v541 = vmul.f32 %v539, %v540
    %v542 = vsub.f32 1.0, %v541
    %v543 = vmul.f32 %v540, %v542
    %v544 = vadd.f32 %v540, %v543
    %vm545 = vweird.f32 %v539
    %vm546 = vweird.f32 %v540
    %vm547 = vmor %vm545, %vm546
    %v548 = vsel %vm547, %v540, %v544
    %v549 = vand.u32 2147483647, %v539
    %vm550 = vcmp.eq.f32.partialorder %v549, 8.507059e+37
    %v551 = vand.u32 %v539, 2147483648
    %v552 = vor.u32 1.1754944e-38, %v551
    %v553 = vsel %vm550, %v552, %v548
    %v554 = vmul.f32 1.0, %v553
    %v555 = vtanh.pop %v535
    %v556 = vmul.f32 %v554, %v417
    %558 = vrot.lane.b32.xlu0 %v555, 64
    %v559 = vpop.permute.xlu0 %558
    %v561 = vmul.f32 %v554, %v559
    %563 = vrot.lane.b32.xlu0 %v561, 32
    %v564 = vpop.permute.xlu0 %563
    %v566 = vadd.f32 %v556, %v564
    %v567 = vtanh.pop %v566
    %569 = vrot.lane.b32.xlu0 %v567, 64
    %v570 = vpop.permute.xlu0 %569
    %v572 = vmul.f32 %v554, %v570
    %574 = vrot.lane.b32.xlu0 %v572, 32
    %v575 = vpop.permute.xlu0 %574
    %v576 = vsel %vm215, %v575, 0
    %578 = vmatpush.msra.mxu0 0.0
    %579 = vmatpush.msra.mxu0 0.0
    %580 = vmatpush.msra.mxu0 0.0
    %581 = vmatpush.msra.mxu0 0.0
    %582 = vmatpush.msra.mxu0 0.0
    %583 = vmatpush.msra.mxu0 0.0
    %584 = vmatpush.msra.mxu0 0.0
    %585 = vmatpush.msra.mxu0 0.0
    %586 = vmatpush.msra.mxu0 0.0
    %587 = vmatpush.msra.mxu0 0.0
    %588 = vmatpush.msra.mxu0 0.0
    %589 = vmatpush.msra.mxu0 0.0
    %590 = vmatpush.msra.mxu0 %v70
    %591 = vmatpush.msra.mxu0 %v69
    %592 = vmatpush.msra.mxu0 %v68
    %593 = vmatpush.msra.mxu0 %v67
    %594 = vmatmul.f32.gmra.mxu0 %v576
    %v595 = vpop.f32.mrf.mxu0
    %v596 = vadd.f32 0.0, %v595
    %597 = vdwg.mxu0
    %v598 = vadd.f32 %v303, %v596
    %600 = vrot.lane.b32.xlu0 %v512, 32
    %v601 = vpop.permute.xlu0 %600
    %v602 = vsel %vm215, %v601, 0
    %604 = vmatpush.msra.mxu0 0.0
    %605 = vmatpush.msra.mxu0 0.0
    %606 = vmatpush.msra.mxu0 0.0
    %607 = vmatpush.msra.mxu0 0.0
    %608 = vmatpush.msra.mxu0 0.0
    %609 = vmatpush.msra.mxu0 0.0
    %610 = vmatpush.msra.mxu0 0.0
    %611 = vmatpush.msra.mxu0 0.0
    %612 = vmatpush.msra.mxu0 0.0
    %613 = vmatpush.msra.mxu0 0.0
    %614 = vmatpush.msra.mxu0 0.0
    %615 = vmatpush.msra.mxu0 0.0
    %616 = vmatpush.msra.mxu0 %v78
    %617 = vmatpush.msra.mxu0 %v77
    %618 = vmatpush.msra.mxu0 %v76
    %619 = vmatpush.msra.mxu0 %v75
    %620 = vmatmul.f32.gmra.mxu0 %v602
    %v621 = vpop.f32.mrf.mxu0
    %v622 = vadd.f32 0.0, %v621
    %623 = vdwg.mxu0
    %v624 = vadd.f32 %v598, %v622
    %v625 = vxor.u32 %v624, 2147483648
    %v626 = vmul.f32 %v625, 1.442695
    %v627 = vpow.pop %v626
    %v628 = vadd.f32 %v627, 1.0
    %v629 = vrcp.pop %v628
    %v630 = vmul.f32 %v628, %v629
    %v631 = vsub.f32 1.0, %v630
    %v632 = vmul.f32 %v629, %v631
    %v633 = vadd.f32 %v629, %v632
    %vm634 = vweird.f32 %v628
    %vm635 = vweird.f32 %v629
    %vm636 = vmor %vm634, %vm635
    %v637 = vsel %vm636, %v629, %v633
    %v638 = vand.u32 2147483647, %v628
    %vm639 = vcmp.eq.f32.partialorder %v638, 8.507059e+37
    %v640 = vand.u32 %v628, 2147483648
    %v641 = vor.u32 1.1754944e-38, %v640
    %v642 = vsel %vm639, %v641, %v637
    %v643 = vmul.f32 1.0, %v642
    %v644 = vtanh.pop %v624
    %v645 = vmul.f32 %v643, %v506
    %647 = vrot.lane.b32.xlu0 %v644, 64
    %v648 = vpop.permute.xlu0 %647
    %v650 = vmul.f32 %v643, %v648
    %652 = vrot.lane.b32.xlu0 %v650, 32
    %v653 = vpop.permute.xlu0 %652
    %v655 = vadd.f32 %v645, %v653
    %v656 = vtanh.pop %v655
    %658 = vrot.lane.b32.xlu0 %v656, 64
    %v659 = vpop.permute.xlu0 %658
    %v661 = vmul.f32 %v643, %v659
    %s662 = scalar_lea.vmem [#allocation2], 6
    %v663 = vld [vmem:[%s662] sm:$0x3]
    %664 = vmatpush.msra.mxu0 0.0
    %665 = vmatpush.msra.mxu0 0.0
    %666 = vmatpush.msra.mxu0 0.0
    %667 = vmatpush.msra.mxu0 0.0
    %668 = vmatpush.msra.mxu0 0.0
    %669 = vmatpush.msra.mxu0 0.0
    %670 = vmatpush.msra.mxu0 0.0
    %671 = vmatpush.msra.mxu0 0.0
    %672 = vmatpush.msra.mxu0 0.0
    %673 = vmatpush.msra.mxu0 0.0
    %674 = vmatpush.msra.mxu0 0.0
    %675 = vmatpush.msra.mxu0 0.0
    %676 = vmatpush.msra.mxu0 %v74
    %677 = vmatpush.msra.mxu0 %v73
    %678 = vmatpush.msra.mxu0 %v72
    %679 = vmatpush.msra.mxu0 %v71
    %680 = vmatmul.f32.gmra.mxu0 %v576
    %v681 = vpop.f32.mrf.mxu0
    %v682 = vadd.f32 0.0, %v681
    %683 = vdwg.mxu0
    %v684 = vadd.f32 %v663, %v682
    %v685 = vxor.u32 %v684, 2147483648
    %v686 = vmul.f32 %v685, 1.442695
    %v687 = vpow.pop %v686
    %v688 = vadd.f32 %v687, 1.0
    %v689 = vrcp.pop %v688
    %v690 = vmul.f32 %v688, %v689
    %v691 = vsub.f32 1.0, %v690
    %v692 = vmul.f32 %v689, %v691
    %v693 = vadd.f32 %v689, %v692
    %vm694 = vweird.f32 %v688
    %vm695 = vweird.f32 %v689
    %vm696 = vmor %vm694, %vm695
    %v697 = vsel %vm696, %v689, %v693
    %v698 = vand.u32 2147483647, %v688
    %vm699 = vcmp.eq.f32.partialorder %v698, 8.507059e+37
    %v700 = vand.u32 %v688, 2147483648
    %v701 = vor.u32 1.1754944e-38, %v700
    %v702 = vsel %vm699, %v701, %v697
    %v703 = vmul.f32 1.0, %v702
    %v704 = vtanh.pop %v684
    %v705 = vmul.f32 %v703, %v566
    %707 = vrot.lane.b32.xlu0 %v704, 64
    %v708 = vpop.permute.xlu0 %707
    %v710 = vmul.f32 %v703, %v708
    %712 = vrot.lane.b32.xlu0 %v710, 32
    %v713 = vpop.permute.xlu0 %712
    %v715 = vadd.f32 %v705, %v713
    %v716 = vtanh.pop %v715
    %718 = vrot.lane.b32.xlu0 %v716, 64
    %v719 = vpop.permute.xlu0 %718
    %v721 = vmul.f32 %v703, %v719
    %723 = vrot.lane.b32.xlu0 %v721, 32
    %v724 = vpop.permute.xlu0 %723
    %v725 = vsel %vm215, %v724, 0
    %727 = vmatpush.msra.mxu0 0.0
    %728 = vmatpush.msra.mxu0 0.0
    %729 = vmatpush.msra.mxu0 0.0
    %730 = vmatpush.msra.mxu0 0.0
    %731 = vmatpush.msra.mxu0 0.0
    %732 = vmatpush.msra.mxu0 0.0
    %733 = vmatpush.msra.mxu0 0.0
    %734 = vmatpush.msra.mxu0 0.0
    %735 = vmatpush.msra.mxu0 0.0
    %736 = vmatpush.msra.mxu0 0.0
    %737 = vmatpush.msra.mxu0 0.0
    %738 = vmatpush.msra.mxu0 0.0
    %739 = vmatpush.msra.mxu0 %v70
    %740 = vmatpush.msra.mxu0 %v69
    %741 = vmatpush.msra.mxu0 %v68
    %742 = vmatpush.msra.mxu0 %v67
    %743 = vmatmul.f32.gmra.mxu0 %v725
    %v744 = vpop.f32.mrf.mxu0
    %v745 = vadd.f32 0.0, %v744
    %746 = vdwg.mxu0
    %v747 = vadd.f32 %v303, %v745
    %749 = vrot.lane.b32.xlu0 %v661, 32
    %v750 = vpop.permute.xlu0 %749
    %v751 = vsel %vm215, %v750, 0
    %753 = vmatpush.msra.mxu0 0.0
    %754 = vmatpush.msra.mxu0 0.0
    %755 = vmatpush.msra.mxu0 0.0
    %756 = vmatpush.msra.mxu0 0.0
    %757 = vmatpush.msra.mxu0 0.0
    %758 = vmatpush.msra.mxu0 0.0
    %759 = vmatpush.msra.mxu0 0.0
    %760 = vmatpush.msra.mxu0 0.0
    %761 = vmatpush.msra.mxu0 0.0
    %762 = vmatpush.msra.mxu0 0.0
    %763 = vmatpush.msra.mxu0 0.0
    %764 = vmatpush.msra.mxu0 0.0
    %765 = vmatpush.msra.mxu0 %v78
    %766 = vmatpush.msra.mxu0 %v77
    %767 = vmatpush.msra.mxu0 %v76
    %768 = vmatpush.msra.mxu0 %v75
    %769 = vmatmul.f32.gmra.mxu0 %v751
    %v770 = vpop.f32.mrf.mxu0
    %v771 = vadd.f32 0.0, %v770
    %772 = vdwg.mxu0
    %v773 = vadd.f32 %v747, %v771
    %v774 = vxor.u32 %v773, 2147483648
    %v775 = vmul.f32 %v774, 1.442695
    %v776 = vpow.pop %v775
    %v777 = vadd.f32 %v776, 1.0
    %v778 = vrcp.pop %v777
    %v779 = vmul.f32 %v777, %v778
    %v780 = vsub.f32 1.0, %v779
    %v781 = vmul.f32 %v778, %v780
    %v782 = vadd.f32 %v778, %v781
    %vm783 = vweird.f32 %v777
    %vm784 = vweird.f32 %v778
    %vm785 = vmor %vm783, %vm784
    %v786 = vsel %vm785, %v778, %v782
    %v787 = vand.u32 2147483647, %v777
    %vm788 = vcmp.eq.f32.partialorder %v787, 8.507059e+37
    %v789 = vand.u32 %v777, 2147483648
    %v790 = vor.u32 1.1754944e-38, %v789
    %v791 = vsel %vm788, %v790, %v786
    %v792 = vmul.f32 1.0, %v791
    %v793 = vtanh.pop %v773
    %v794 = vmul.f32 %v792, %v655
    %796 = vrot.lane.b32.xlu0 %v793, 64
    %v797 = vpop.permute.xlu0 %796
    %v799 = vmul.f32 %v792, %v797
    %801 = vrot.lane.b32.xlu0 %v799, 32
    %v802 = vpop.permute.xlu0 %801
    %v804 = vadd.f32 %v794, %v802
    %v805 = vtanh.pop %v804
    %807 = vrot.lane.b32.xlu0 %v805, 64
    %v808 = vpop.permute.xlu0 %807
    %v810 = vmul.f32 %v792, %v808
    %s811 = scalar_lea.vmem [#allocation2], 8
    %v812 = vld [vmem:[%s811] sm:$0x3]
    %813 = vmatpush.msra.mxu0 0.0
    %814 = vmatpush.msra.mxu0 0.0
    %815 = vmatpush.msra.mxu0 0.0
    %816 = vmatpush.msra.mxu0 0.0
    %817 = vmatpush.msra.mxu0 0.0
    %818 = vmatpush.msra.mxu0 0.0
    %819 = vmatpush.msra.mxu0 0.0
    %820 = vmatpush.msra.mxu0 0.0
    %821 = vmatpush.msra.mxu0 0.0
    %822 = vmatpush.msra.mxu0 0.0
    %823 = vmatpush.msra.mxu0 0.0
    %824 = vmatpush.msra.mxu0 0.0
    %825 = vmatpush.msra.mxu0 %v74
    %826 = vmatpush.msra.mxu0 %v73
    %827 = vmatpush.msra.mxu0 %v72
    %828 = vmatpush.msra.mxu0 %v71
    %829 = vmatmul.f32.gmra.mxu0 %v725
    %v830 = vpop.f32.mrf.mxu0
    %v831 = vadd.f32 0.0, %v830
    %832 = vdwg.mxu0
    %v833 = vadd.f32 %v812, %v831
    %v834 = vxor.u32 %v833, 2147483648
    %v835 = vmul.f32 %v834, 1.442695
    %v836 = vpow.pop %v835
    %v837 = vadd.f32 %v836, 1.0
    %v838 = vrcp.pop %v837
    %v839 = vmul.f32 %v837, %v838
    %v840 = vsub.f32 1.0, %v839
    %v841 = vmul.f32 %v838, %v840
    %v842 = vadd.f32 %v838, %v841
    %vm843 = vweird.f32 %v837
    %vm844 = vweird.f32 %v838
    %vm845 = vmor %vm843, %vm844
    %v846 = vsel %vm845, %v838, %v842
    %v847 = vand.u32 2147483647, %v837
    %vm848 = vcmp.eq.f32.partialorder %v847, 8.507059e+37
    %v849 = vand.u32 %v837, 2147483648
    %v850 = vor.u32 1.1754944e-38, %v849
    %v851 = vsel %vm848, %v850, %v846
    %v852 = vmul.f32 1.0, %v851
    %v853 = vtanh.pop %v833
    %v854 = vmul.f32 %v852, %v715
    %856 = vrot.lane.b32.xlu0 %v853, 64
    %v857 = vpop.permute.xlu0 %856
    %v859 = vmul.f32 %v852, %v857
    %861 = vrot.lane.b32.xlu0 %v859, 32
    %v862 = vpop.permute.xlu0 %861
    %v864 = vadd.f32 %v854, %v862
    %v865 = vtanh.pop %v864
    %867 = vrot.lane.b32.xlu0 %v865, 64
    %v868 = vpop.permute.xlu0 %867
    %v870 = vmul.f32 %v852, %v868
    %872 = vrot.lane.b32.xlu0 %v870, 32
    %v873 = vpop.permute.xlu0 %872
    %v874 = vsel %vm215, %v873, 0
    %876 = vmatpush.msra.mxu0 0.0
    %877 = vmatpush.msra.mxu0 0.0
    %878 = vmatpush.msra.mxu0 0.0
    %879 = vmatpush.msra.mxu0 0.0
    %880 = vmatpush.msra.mxu0 0.0
    %881 = vmatpush.msra.mxu0 0.0
    %882 = vmatpush.msra.mxu0 0.0
    %883 = vmatpush.msra.mxu0 0.0
    %884 = vmatpush.msra.mxu0 0.0
    %885 = vmatpush.msra.mxu0 0.0
    %886 = vmatpush.msra.mxu0 0.0
    %887 = vmatpush.msra.mxu0 0.0
    %888 = vmatpush.msra.mxu0 %v70
    %889 = vmatpush.msra.mxu0 %v69
    %890 = vmatpush.msra.mxu0 %v68
    %891 = vmatpush.msra.mxu0 %v67
    %892 = vmatmul.f32.gmra.mxu0 %v874
    %v893 = vpop.f32.mrf.mxu0
    %v894 = vadd.f32 0.0, %v893
    %895 = vdwg.mxu0
    %v896 = vadd.f32 %v303, %v894
    %898 = vrot.lane.b32.xlu0 %v810, 32
    %v899 = vpop.permute.xlu0 %898
    %v900 = vsel %vm215, %v899, 0
    %902 = vmatpush.msra.mxu0 0.0
    %903 = vmatpush.msra.mxu0 0.0
    %904 = vmatpush.msra.mxu0 0.0
    %905 = vmatpush.msra.mxu0 0.0
    %906 = vmatpush.msra.mxu0 0.0
    %907 = vmatpush.msra.mxu0 0.0
    %908 = vmatpush.msra.mxu0 0.0
    %909 = vmatpush.msra.mxu0 0.0
    %910 = vmatpush.msra.mxu0 0.0
    %911 = vmatpush.msra.mxu0 0.0
    %912 = vmatpush.msra.mxu0 0.0
    %913 = vmatpush.msra.mxu0 0.0
    %914 = vmatpush.msra.mxu0 %v78
    %915 = vmatpush.msra.mxu0 %v77
    %916 = vmatpush.msra.mxu0 %v76
    %917 = vmatpush.msra.mxu0 %v75
    %918 = vmatmul.f32.gmra.mxu0 %v900
    %v919 = vpop.f32.mrf.mxu0
    %v920 = vadd.f32 0.0, %v919
    %921 = vdwg.mxu0
    %v922 = vadd.f32 %v896, %v920
    %v923 = vxor.u32 %v922, 2147483648
    %v924 = vmul.f32 %v923, 1.442695
    %v925 = vpow.pop %v924
    %v926 = vadd.f32 %v925, 1.0
    %v927 = vrcp.pop %v926
    %v928 = vmul.f32 %v926, %v927
    %v929 = vsub.f32 1.0, %v928
    %v930 = vmul.f32 %v927, %v929
    %v931 = vadd.f32 %v927, %v930
    %vm932 = vweird.f32 %v926
    %vm933 = vweird.f32 %v927
    %vm934 = vmor %vm932, %vm933
    %v935 = vsel %vm934, %v927, %v931
    %v936 = vand.u32 2147483647, %v926
    %vm937 = vcmp.eq.f32.partialorder %v936, 8.507059e+37
    %v938 = vand.u32 %v926, 2147483648
    %v939 = vor.u32 1.1754944e-38, %v938
    %v940 = vsel %vm937, %v939, %v935
    %v941 = vmul.f32 1.0, %v940
    %v942 = vtanh.pop %v922
    %v943 = vmul.f32 %v941, %v804
    %945 = vrot.lane.b32.xlu0 %v942, 64
    %v946 = vpop.permute.xlu0 %945
    %v948 = vmul.f32 %v941, %v946
    %950 = vrot.lane.b32.xlu0 %v948, 32
    %v951 = vpop.permute.xlu0 %950
    %v953 = vadd.f32 %v943, %v951
    %v954 = vtanh.pop %v953
    %956 = vrot.lane.b32.xlu0 %v954, 64
    %v957 = vpop.permute.xlu0 %956
    %v959 = vmul.f32 %v941, %v957
    %s960 = scalar_lea.vmem [#allocation2], 10
    %v961 = vld [vmem:[%s960] sm:$0x3]
    %962 = vmatpush.msra.mxu0 0.0
    %963 = vmatpush.msra.mxu0 0.0
    %964 = vmatpush.msra.mxu0 0.0
    %965 = vmatpush.msra.mxu0 0.0
    %966 = vmatpush.msra.mxu0 0.0
    %967 = vmatpush.msra.mxu0 0.0
    %968 = vmatpush.msra.mxu0 0.0
    %969 = vmatpush.msra.mxu0 0.0
    %970 = vmatpush.msra.mxu0 0.0
    %971 = vmatpush.msra.mxu0 0.0
    %972 = vmatpush.msra.mxu0 0.0
    %973 = vmatpush.msra.mxu0 0.0
    %974 = vmatpush.msra.mxu0 %v74
    %975 = vmatpush.msra.mxu0 %v73
    %976 = vmatpush.msra.mxu0 %v72
    %977 = vmatpush.msra.mxu0 %v71
    %978 = vmatmul.f32.gmra.mxu0 %v874
    %v979 = vpop.f32.mrf.mxu0
    %v980 = vadd.f32 0.0, %v979
    %981 = vdwg.mxu0
    %v982 = vadd.f32 %v961, %v980
    %v983 = vxor.u32 %v982, 2147483648
    %v984 = vmul.f32 %v983, 1.442695
    %v985 = vpow.pop %v984
    %v986 = vadd.f32 %v985, 1.0
    %v987 = vrcp.pop %v986
    %v988 = vmul.f32 %v986, %v987
    %v989 = vsub.f32 1.0, %v988
    %v990 = vmul.f32 %v987, %v989
    %v991 = vadd.f32 %v987, %v990
    %vm992 = vweird.f32 %v986
    %vm993 = vweird.f32 %v987
    %vm994 = vmor %vm992, %vm993
    %v995 = vsel %vm994, %v987, %v991
    %v996 = vand.u32 2147483647, %v986
    %vm997 = vcmp.eq.f32.partialorder %v996, 8.507059e+37
    %v998 = vand.u32 %v986, 2147483648
    %v999 = vor.u32 1.1754944e-38, %v998
    %v1000 = vsel %vm997, %v999, %v995
    %v1001 = vmul.f32 1.0, %v1000
    %v1002 = vtanh.pop %v982
    %v1003 = vmul.f32 %v1001, %v864
    %1005 = vrot.lane.b32.xlu0 %v1002, 64
    %v1006 = vpop.permute.xlu0 %1005
    %v1008 = vmul.f32 %v1001, %v1006
    %1010 = vrot.lane.b32.xlu0 %v1008, 32
    %v1011 = vpop.permute.xlu0 %1010
    %v1013 = vadd.f32 %v1003, %v1011
    %v1014 = vtanh.pop %v1013
    %1016 = vrot.lane.b32.xlu0 %v1014, 64
    %v1017 = vpop.permute.xlu0 %1016
    %v1019 = vmul.f32 %v1001, %v1017
    %1021 = vrot.lane.b32.xlu0 %v1019, 32
    %v1022 = vpop.permute.xlu0 %1021
    %v1023 = vsel %vm215, %v1022, 0
    %1025 = vmatpush.msra.mxu0 0.0
    %1026 = vmatpush.msra.mxu0 0.0
    %1027 = vmatpush.msra.mxu0 0.0
    %1028 = vmatpush.msra.mxu0 0.0
    %1029 = vmatpush.msra.mxu0 0.0
    %1030 = vmatpush.msra.mxu0 0.0
    %1031 = vmatpush.msra.mxu0 0.0
    %1032 = vmatpush.msra.mxu0 0.0
    %1033 = vmatpush.msra.mxu0 0.0
    %1034 = vmatpush.msra.mxu0 0.0
    %1035 = vmatpush.msra.mxu0 0.0
    %1036 = vmatpush.msra.mxu0 0.0
    %1037 = vmatpush.msra.mxu0 %v70
    %1038 = vmatpush.msra.mxu0 %v69
    %1039 = vmatpush.msra.mxu0 %v68
    %1040 = vmatpush.msra.mxu0 %v67
    %1041 = vmatmul.f32.gmra.mxu0 %v1023
    %v1042 = vpop.f32.mrf.mxu0
    %v1043 = vadd.f32 0.0, %v1042
    %1044 = vdwg.mxu0
    %v1045 = vadd.f32 %v303, %v1043
    %1047 = vrot.lane.b32.xlu0 %v959, 32
    %v1048 = vpop.permute.xlu0 %1047
    %v1049 = vsel %vm215, %v1048, 0
    %1051 = vmatpush.msra.mxu0 0.0
    %1052 = vmatpush.msra.mxu0 0.0
    %1053 = vmatpush.msra.mxu0 0.0
    %1054 = vmatpush.msra.mxu0 0.0
    %1055 = vmatpush.msra.mxu0 0.0
    %1056 = vmatpush.msra.mxu0 0.0
    %1057 = vmatpush.msra.mxu0 0.0
    %1058 = vmatpush.msra.mxu0 0.0
    %1059 = vmatpush.msra.mxu0 0.0
    %1060 = vmatpush.msra.mxu0 0.0
    %1061 = vmatpush.msra.mxu0 0.0
    %1062 = vmatpush.msra.mxu0 0.0
    %1063 = vmatpush.msra.mxu0 %v78
    %1064 = vmatpush.msra.mxu0 %v77
    %1065 = vmatpush.msra.mxu0 %v76
    %1066 = vmatpush.msra.mxu0 %v75
    %1067 = vmatmul.f32.gmra.mxu0 %v1049
    %v1068 = vpop.f32.mrf.mxu0
    %v1069 = vadd.f32 0.0, %v1068
    %1070 = vdwg.mxu0
    %v1071 = vadd.f32 %v1045, %v1069
    %v1072 = vxor.u32 %v1071, 2147483648
    %v1073 = vmul.f32 %v1072, 1.442695
    %v1074 = vpow.pop %v1073
    %v1075 = vadd.f32 %v1074, 1.0
    %v1076 = vrcp.pop %v1075
    %v1077 = vmul.f32 %v1075, %v1076
    %v1078 = vsub.f32 1.0, %v1077
    %v1079 = vmul.f32 %v1076, %v1078
    %v1080 = vadd.f32 %v1076, %v1079
    %vm1081 = vweird.f32 %v1075
    %vm1082 = vweird.f32 %v1076
    %vm1083 = vmor %vm1081, %vm1082
    %v1084 = vsel %vm1083, %v1076, %v1080
    %v1085 = vand.u32 2147483647, %v1075
    %vm1086 = vcmp.eq.f32.partialorder %v1085, 8.507059e+37
    %v1087 = vand.u32 %v1075, 2147483648
    %v1088 = vor.u32 1.1754944e-38, %v1087
    %v1089 = vsel %vm1086, %v1088, %v1084
    %v1090 = vmul.f32 1.0, %v1089
    %v1091 = vtanh.pop %v1071
    %v1092 = vmul.f32 %v1090, %v953
    %1094 = vrot.lane.b32.xlu0 %v1091, 64
    %v1095 = vpop.permute.xlu0 %1094
    %v1097 = vmul.f32 %v1090, %v1095
    %1099 = vrot.lane.b32.xlu0 %v1097, 32
    %v1100 = vpop.permute.xlu0 %1099
    %v1102 = vadd.f32 %v1092, %v1100
    %v1103 = vtanh.pop %v1102
    %1105 = vrot.lane.b32.xlu0 %v1103, 64
    %v1106 = vpop.permute.xlu0 %1105
    %v1108 = vmul.f32 %v1090, %v1106
    %s1109 = scalar_lea.vmem [#allocation2], 12
    %v1110 = vld [vmem:[%s1109] sm:$0x3]
    %1111 = vmatpush.msra.mxu0 0.0
    %1112 = vmatpush.msra.mxu0 0.0
    %1113 = vmatpush.msra.mxu0 0.0
    %1114 = vmatpush.msra.mxu0 0.0
    %1115 = vmatpush.msra.mxu0 0.0
    %1116 = vmatpush.msra.mxu0 0.0
    %1117 = vmatpush.msra.mxu0 0.0
    %1118 = vmatpush.msra.mxu0 0.0
    %1119 = vmatpush.msra.mxu0 0.0
    %1120 = vmatpush.msra.mxu0 0.0
    %1121 = vmatpush.msra.mxu0 0.0
    %1122 = vmatpush.msra.mxu0 0.0
    %1123 = vmatpush.msra.mxu0 %v74
    %1124 = vmatpush.msra.mxu0 %v73
    %1125 = vmatpush.msra.mxu0 %v72
    %1126 = vmatpush.msra.mxu0 %v71
    %1127 = vmatmul.f32.gmra.mxu0 %v1023
    %v1128 = vpop.f32.mrf.mxu0
    %v1129 = vadd.f32 0.0, %v1128
    %1130 = vdwg.mxu0
    %v1131 = vadd.f32 %v1110, %v1129
    %v1132 = vxor.u32 %v1131, 2147483648
    %v1133 = vmul.f32 %v1132, 1.442695
    %v1134 = vpow.pop %v1133
    %v1135 = vadd.f32 %v1134, 1.0
    %v1136 = vrcp.pop %v1135
    %v1137 = vmul.f32 %v1135, %v1136
    %v1138 = vsub.f32 1.0, %v1137
    %v1139 = vmul.f32 %v1136, %v1138
    %v1140 = vadd.f32 %v1136, %v1139
    %vm1141 = vweird.f32 %v1135
    %vm1142 = vweird.f32 %v1136
    %vm1143 = vmor %vm1141, %vm1142
    %v1144 = vsel %vm1143, %v1136, %v1140
    %v1145 = vand.u32 2147483647, %v1135
    %vm1146 = vcmp.eq.f32.partialorder %v1145, 8.507059e+37
    %v1147 = vand.u32 %v1135, 2147483648
    %v1148 = vor.u32 1.1754944e-38, %v1147
    %v1149 = vsel %vm1146, %v1148, %v1144
    %v1150 = vmul.f32 1.0, %v1149
    %v1151 = vtanh.pop %v1131
    %v1152 = vmul.f32 %v1150, %v1013
    %1154 = vrot.lane.b32.xlu0 %v1151, 64
    %v1155 = vpop.permute.xlu0 %1154
    %v1157 = vmul.f32 %v1150, %v1155
    %1159 = vrot.lane.b32.xlu0 %v1157, 32
    %v1160 = vpop.permute.xlu0 %1159
    %v1162 = vadd.f32 %v1152, %v1160
    %v1163 = vtanh.pop %v1162
    %1165 = vrot.lane.b32.xlu0 %v1163, 64
    %v1166 = vpop.permute.xlu0 %1165
    %v1168 = vmul.f32 %v1150, %v1166
    %1170 = vrot.lane.b32.xlu0 %v1168, 32
    %v1171 = vpop.permute.xlu0 %1170
    %v1172 = vsel %vm215, %v1171, 0
    %1174 = vmatpush.msra.mxu0 0.0
    %1175 = vmatpush.msra.mxu0 0.0
    %1176 = vmatpush.msra.mxu0 0.0
    %1177 = vmatpush.msra.mxu0 0.0
    %1178 = vmatpush.msra.mxu0 0.0
    %1179 = vmatpush.msra.mxu0 0.0
    %1180 = vmatpush.msra.mxu0 0.0
    %1181 = vmatpush.msra.mxu0 0.0
    %1182 = vmatpush.msra.mxu0 0.0
    %1183 = vmatpush.msra.mxu0 0.0
    %1184 = vmatpush.msra.mxu0 0.0
    %1185 = vmatpush.msra.mxu0 0.0
    %1186 = vmatpush.msra.mxu0 %v70
    %1187 = vmatpush.msra.mxu0 %v69
    %1188 = vmatpush.msra.mxu0 %v68
    %1189 = vmatpush.msra.mxu0 %v67
    %1190 = vmatmul.f32.gmra.mxu0 %v1172
    %v1191 = vpop.f32.mrf.mxu0
    %v1192 = vadd.f32 0.0, %v1191
    %1193 = vdwg.mxu0
    %v1194 = vadd.f32 %v303, %v1192
    %1196 = vrot.lane.b32.xlu0 %v1108, 32
    %v1197 = vpop.permute.xlu0 %1196
    %v1198 = vsel %vm215, %v1197, 0
    %1200 = vmatpush.msra.mxu0 0.0
    %1201 = vmatpush.msra.mxu0 0.0
    %1202 = vmatpush.msra.mxu0 0.0
    %1203 = vmatpush.msra.mxu0 0.0
    %1204 = vmatpush.msra.mxu0 0.0
    %1205 = vmatpush.msra.mxu0 0.0
    %1206 = vmatpush.msra.mxu0 0.0
    %1207 = vmatpush.msra.mxu0 0.0
    %1208 = vmatpush.msra.mxu0 0.0
    %1209 = vmatpush.msra.mxu0 0.0
    %1210 = vmatpush.msra.mxu0 0.0
    %1211 = vmatpush.msra.mxu0 0.0
    %1212 = vmatpush.msra.mxu0 %v78
    %1213 = vmatpush.msra.mxu0 %v77
    %1214 = vmatpush.msra.mxu0 %v76
    %1215 = vmatpush.msra.mxu0 %v75
    %1216 = vmatmul.f32.gmra.mxu0 %v1198
    %v1217 = vpop.f32.mrf.mxu0
    %v1218 = vadd.f32 0.0, %v1217
    %1219 = vdwg.mxu0
    %v1220 = vadd.f32 %v1194, %v1218
    %v1221 = vxor.u32 %v1220, 2147483648
    %v1222 = vmul.f32 %v1221, 1.442695
    %v1223 = vpow.pop %v1222
    %v1224 = vadd.f32 %v1223, 1.0
    %v1225 = vrcp.pop %v1224
    %v1226 = vmul.f32 %v1224, %v1225
    %v1227 = vsub.f32 1.0, %v1226
    %v1228 = vmul.f32 %v1225, %v1227
    %v1229 = vadd.f32 %v1225, %v1228
    %vm1230 = vweird.f32 %v1224
    %vm1231 = vweird.f32 %v1225
    %vm1232 = vmor %vm1230, %vm1231
    %v1233 = vsel %vm1232, %v1225, %v1229
    %v1234 = vand.u32 2147483647, %v1224
    %vm1235 = vcmp.eq.f32.partialorder %v1234, 8.507059e+37
    %v1236 = vand.u32 %v1224, 2147483648
    %v1237 = vor.u32 1.1754944e-38, %v1236
    %v1238 = vsel %vm1235, %v1237, %v1233
    %v1239 = vmul.f32 1.0, %v1238
    %v1240 = vtanh.pop %v1220
    %v1241 = vmul.f32 %v1239, %v1102
    %1243 = vrot.lane.b32.xlu0 %v1240, 64
    %v1244 = vpop.permute.xlu0 %1243
    %v1246 = vmul.f32 %v1239, %v1244
    %1248 = vrot.lane.b32.xlu0 %v1246, 32
    %v1249 = vpop.permute.xlu0 %1248
    %v1251 = vadd.f32 %v1241, %v1249
    %v1252 = vtanh.pop %v1251
    %1254 = vrot.lane.b32.xlu0 %v1252, 64
    %v1255 = vpop.permute.xlu0 %1254
    %v1257 = vmul.f32 %v1239, %v1255
    %s1258 = scalar_lea.vmem [#allocation2], 14
    %v1259 = vld [vmem:[%s1258] sm:$0x3]
    %1260 = vmatpush.msra.mxu0 0.0
    %1261 = vmatpush.msra.mxu0 0.0
    %1262 = vmatpush.msra.mxu0 0.0
    %1263 = vmatpush.msra.mxu0 0.0
    %1264 = vmatpush.msra.mxu0 0.0
    %1265 = vmatpush.msra.mxu0 0.0
    %1266 = vmatpush.msra.mxu0 0.0
    %1267 = vmatpush.msra.mxu0 0.0
    %1268 = vmatpush.msra.mxu0 0.0
    %1269 = vmatpush.msra.mxu0 0.0
    %1270 = vmatpush.msra.mxu0 0.0
    %1271 = vmatpush.msra.mxu0 0.0
    %1272 = vmatpush.msra.mxu0 %v74
    %1273 = vmatpush.msra.mxu0 %v73
    %1274 = vmatpush.msra.mxu0 %v72
    %1275 = vmatpush.msra.mxu0 %v71
    %1276 = vmatmul.f32.gmra.mxu0 %v1172
    %v1277 = vpop.f32.mrf.mxu0
    %v1278 = vadd.f32 0.0, %v1277
    %1279 = vdwg.mxu0
    %v1280 = vadd.f32 %v1259, %v1278
    %v1281 = vxor.u32 %v1280, 2147483648
    %v1282 = vmul.f32 %v1281, 1.442695
    %v1283 = vpow.pop %v1282
    %v1284 = vadd.f32 %v1283, 1.0
    %v1285 = vrcp.pop %v1284
    %v1286 = vmul.f32 %v1284, %v1285
    %v1287 = vsub.f32 1.0, %v1286
    %v1288 = vmul.f32 %v1285, %v1287
    %v1289 = vadd.f32 %v1285, %v1288
    %vm1290 = vweird.f32 %v1284
    %vm1291 = vweird.f32 %v1285
    %vm1292 = vmor %vm1290, %vm1291
    %v1293 = vsel %vm1292, %v1285, %v1289
    %v1294 = vand.u32 2147483647, %v1284
    %vm1295 = vcmp.eq.f32.partialorder %v1294, 8.507059e+37
    %v1296 = vand.u32 %v1284, 2147483648
    %v1297 = vor.u32 1.1754944e-38, %v1296
    %v1298 = vsel %vm1295, %v1297, %v1293
    %v1299 = vmul.f32 1.0, %v1298
    %v1300 = vtanh.pop %v1280
    %v1301 = vmul.f32 %v1299, %v1162
    %1303 = vrot.lane.b32.xlu0 %v1300, 64
    %v1304 = vpop.permute.xlu0 %1303
    %v1306 = vmul.f32 %v1299, %v1304
    %1308 = vrot.lane.b32.xlu0 %v1306, 32
    %v1309 = vpop.permute.xlu0 %1308
    %v1311 = vadd.f32 %v1301, %v1309
    %v1312 = vtanh.pop %v1311
    %1314 = vrot.lane.b32.xlu0 %v1312, 64
    %v1315 = vpop.permute.xlu0 %1314
    %v1317 = vmul.f32 %v1299, %v1315
    %1319 = vrot.lane.b32.xlu0 %v1317, 32
    %v1320 = vpop.permute.xlu0 %1319
    %v1321 = vsel %vm215, %v1320, 0
    %1323 = vmatpush.msra.mxu0 0.0
    %1324 = vmatpush.msra.mxu0 0.0
    %1325 = vmatpush.msra.mxu0 0.0
    %1326 = vmatpush.msra.mxu0 0.0
    %1327 = vmatpush.msra.mxu0 0.0
    %1328 = vmatpush.msra.mxu0 0.0
    %1329 = vmatpush.msra.mxu0 0.0
    %1330 = vmatpush.msra.mxu0 0.0
    %1331 = vmatpush.msra.mxu0 0.0
    %1332 = vmatpush.msra.mxu0 0.0
    %1333 = vmatpush.msra.mxu0 0.0
    %1334 = vmatpush.msra.mxu0 0.0
    %1335 = vmatpush.msra.mxu0 %v70
    %1336 = vmatpush.msra.mxu0 %v69
    %1337 = vmatpush.msra.mxu0 %v68
    %1338 = vmatpush.msra.mxu0 %v67
    %1339 = vmatmul.f32.gmra.mxu0 %v1321
    %v1340 = vpop.f32.mrf.mxu0
    %v1341 = vadd.f32 0.0, %v1340
    %1342 = vdwg.mxu0
    %v1343 = vadd.f32 %v303, %v1341
    %1345 = vrot.lane.b32.xlu0 %v1257, 32
    %v1346 = vpop.permute.xlu0 %1345
    %v1347 = vsel %vm215, %v1346, 0
    %1349 = vmatpush.msra.mxu0 0.0
    %1350 = vmatpush.msra.mxu0 0.0
    %1351 = vmatpush.msra.mxu0 0.0
    %1352 = vmatpush.msra.mxu0 0.0
    %1353 = vmatpush.msra.mxu0 0.0
    %1354 = vmatpush.msra.mxu0 0.0
    %1355 = vmatpush.msra.mxu0 0.0
    %1356 = vmatpush.msra.mxu0 0.0
    %1357 = vmatpush.msra.mxu0 0.0
    %1358 = vmatpush.msra.mxu0 0.0
    %1359 = vmatpush.msra.mxu0 0.0
    %1360 = vmatpush.msra.mxu0 0.0
    %1361 = vmatpush.msra.mxu0 %v78
    %1362 = vmatpush.msra.mxu0 %v77
    %1363 = vmatpush.msra.mxu0 %v76
    %1364 = vmatpush.msra.mxu0 %v75
    %1365 = vmatmul.f32.gmra.mxu0 %v1347
    %v1366 = vpop.f32.mrf.mxu0
    %v1367 = vadd.f32 0.0, %v1366
    %1368 = vdwg.mxu0
    %v1369 = vadd.f32 %v1343, %v1367
    %v1370 = vxor.u32 %v1369, 2147483648
    %v1371 = vmul.f32 %v1370, 1.442695
    %v1372 = vpow.pop %v1371
    %v1373 = vadd.f32 %v1372, 1.0
    %v1374 = vrcp.pop %v1373
    %v1375 = vmul.f32 %v1373, %v1374
    %v1376 = vsub.f32 1.0, %v1375
    %v1377 = vmul.f32 %v1374, %v1376
    %v1378 = vadd.f32 %v1374, %v1377
    %vm1379 = vweird.f32 %v1373
    %vm1380 = vweird.f32 %v1374
    %vm1381 = vmor %vm1379, %vm1380
    %v1382 = vsel %vm1381, %v1374, %v1378
    %v1383 = vand.u32 2147483647, %v1373
    %vm1384 = vcmp.eq.f32.partialorder %v1383, 8.507059e+37
    %v1385 = vand.u32 %v1373, 2147483648
    %v1386 = vor.u32 1.1754944e-38, %v1385
    %v1387 = vsel %vm1384, %v1386, %v1382
    %v1388 = vmul.f32 1.0, %v1387
    %v1389 = vtanh.pop %v1369
    %v1390 = vmul.f32 %v1388, %v1251
    %1392 = vrot.lane.b32.xlu0 %v1389, 64
    %v1393 = vpop.permute.xlu0 %1392
    %v1395 = vmul.f32 %v1388, %v1393
    %1397 = vrot.lane.b32.xlu0 %v1395, 32
    %v1398 = vpop.permute.xlu0 %1397
    %v1400 = vadd.f32 %v1390, %v1398
    %v1401 = vtanh.pop %v1400
    %1403 = vrot.lane.b32.xlu0 %v1401, 64
    %v1404 = vpop.permute.xlu0 %1403
    %v1406 = vmul.f32 %v1388, %v1404
    %v1407 = vld [vmem:[%s7] sm:$0xff]
    %v1408 = vld [vmem:[%s7 + $0x8] sm:$0xff]
    %v1409 = vld [vmem:[%s7 + $0x10] sm:$0xff]
    %v1410 = vld [vmem:[%s7 + $0x18] sm:$0xff]
    %v1411 = vld [vmem:[%s8] sm:$0x1]
    %v1413 = vperm.slane %v1411, 0
    %1416 = vrot.lane.b32.xlu0 %v1406, 32
    %v1417 = vpop.permute.xlu0 %1416
    %v1418 = vsel %vm215, %v1417, 0
    %1420 = vmatpush.msra.mxu0 0.0
    %1421 = vmatpush.msra.mxu0 0.0
    %1422 = vmatpush.msra.mxu0 0.0
    %1423 = vmatpush.msra.mxu0 0.0
    %1424 = vmatpush.msra.mxu0 0.0
    %1425 = vmatpush.msra.mxu0 0.0
    %1426 = vmatpush.msra.mxu0 0.0
    %1427 = vmatpush.msra.mxu0 0.0
    %1428 = vmatpush.msra.mxu0 0.0
    %1429 = vmatpush.msra.mxu0 0.0
    %1430 = vmatpush.msra.mxu0 0.0
    %1431 = vmatpush.msra.mxu0 0.0
    %1432 = vmatpush.msra.mxu0 %v1410
    %1433 = vmatpush.msra.mxu0 %v1409
    %1434 = vmatpush.msra.mxu0 %v1408
    %1435 = vmatpush.msra.mxu0 %v1407
    %1436 = vmatmul.f32.gmra.mxu0 %v1418
    %v1437 = vpop.f32.mrf.mxu0
    %v1438 = vadd.f32 %v1413, %v1437
    %1439 = vdwg.mxu0
    %1440 = vst [vmem:[#allocation8] sm:$0x3] %v1438
    // Predicated region
    $region46: #{_lstm_forward.1} parent=1 // pred_check
      _
    $region47: #{_lstm_forward.1} parent=1 // pred_check_branch
      %1442 = sbr.rel (0) target = $region49
    $region48: #{_lstm_forward.1} parent=1 // pred_region
      %1444 = vsyncadd [#allocation5], 0
      %s1446 = sshll.u32 [#allocation8], 4
      %s1447 = int_to_ptr.vmem [resolvable:$true] %s1446
      %s1448 = sshll.u32 %s9, 4
      %s1449 = int_to_ptr.hbm [resolvable:$true] %s1448
      %1451 = dma.vmem_to_hbm [thread:$0]  %s1447, 32, %s1449, [#allocation5]
    $region49: #{_lstm_forward.1} parent=1 // pred_fallthru
      _
    // Predicated region
    $region50: #{_lstm_forward.1} parent=1 // pred_check
      _
    $region51: #{_lstm_forward.1} parent=1 // pred_check_branch
      %1453 = sbr.rel (0) target = $region53
    $region52: #{_lstm_forward.1} parent=1 // pred_region
      %1455 = dma.done [#allocation5], 32
    $region53: #{_lstm_forward.1} parent=1 // pred_fallthru
      _
    %1456 = vsyncpa [#allocation4], 1
    %1457 = vsyncpa [#allocation7], 1
    %1458 = vsyncpa [#allocation5], 1

</llo_original>
